<compile_context>
chip_gen: v6e
topology: v6e:2x2x1
jax: 0.10.0
libtpu: 0.0.40
codegen_flags: <defaults>
</compile_context>

<pallas_src>
import functools

import jax
import jax.numpy as jnp
import numpy as np
from jax import lax
from jax.experimental import pallas as pl
from jax.experimental.pallas import tpu as pltpu


# ----------------------------------------------------------------------------
# PixelRNN 'B' mask for a (C_out, C_in, 1, kw) kernel (same logic as the
# PyTorch MaskedConvolution2D.__init__).
# ----------------------------------------------------------------------------
def make_mask(c_out, c_in, kh, kw, mask_type="B"):
    mask = np.ones((c_out, c_in, kh, kw), np.float32)
    cy, cx = kh // 2, kw // 2
    mask[:, :, cy + 1:, :] = 0
    mask[:, :, :, cx + 1:] = 0
    if mask_type == "A":
        if c_in // 3:
            cic, coc = c_in // 3, c_out // 3
            mask[:, :, cy, cx] = 0
            mask[coc:2 * coc, :cic, cy, cx] = 1
            mask[2 * coc:3 * coc, :2 * cic, cy, cx] = 1
        if c_in == 1:
            mask[:, :, cy, cx] = 0
    elif c_in // 3:
        cic, coc = c_in // 3, c_out // 3
        mask[:, :, cy, cx] = 0
        mask[:coc, :cic, cy, cx] = 1
        mask[coc:2 * coc, :2 * cic, cy, cx] = 1
        mask[2 * coc:3 * coc, :, cy, cx] = 1
    return jnp.asarray(mask)


# ----------------------------------------------------------------------------
# Gate-column permutation: reorder the 4*F output channels so the gates come
# out of the matmul as contiguous [f | i | o | g] blocks (each F wide),
# matching the rgb regrouping done by the PyTorch forward.
# ----------------------------------------------------------------------------
def _gate_perm(out_features, rgb_input):
    O = 4 * out_features
    if not rgb_input:
        return np.arange(O)
    assert out_features % 3 == 0, "rgb gate regrouping needs out_features % 3 == 0"
    G = O // 3                       # channels per color group
    g4 = out_features // 3           # channels per gate per color
    perm = [clr * G + j * g4 + t
            for j in range(4) for clr in range(3) for t in range(g4)]
    return np.asarray(perm)


def _pick_rows_per_block(H, max_rows):
    for r in range(min(H, max_rows), 0, -1):
        if H % r == 0:
            return r
    return 1


# ----------------------------------------------------------------------------
# Pallas kernel: one grid step == one block of image rows of the row-LSTM
# recurrence (the rows inside a block run in an unrolled fori_loop).
# ----------------------------------------------------------------------------
def make_kernel(Bt, W, F, O, rows):
    def kernel(i2s_ref, ws_ref, out_ref, hpad_ref, c_ref):
        # Zero the recurrent state once per batch tile (row-block 0).  The
        # W-padding border columns of hpad stay zero forever because we only
        # ever write the interior slice below.
        @pl.when(pl.program_id(1) == 0)
        def _init():
            hpad_ref[...] = jnp.zeros_like(hpad_ref)
            c_ref[...] = jnp.zeros_like(c_ref)

        ws = ws_ref[...]                          # (3F, O) fused s2s weight

        def row_step(r, carry):
            hpad = hpad_ref[...]                  # (Bt, W+2, F), borders == 0
            # im2col over W: one fused (Bt*W, 3F) x (3F, O) MXU matmul
            hcat = jnp.concatenate(
                [hpad[:, 0:W, :], hpad[:, 1:W + 1, :], hpad[:, 2:W + 2, :]],
                axis=2).reshape(Bt * W, 3 * F)
            # i2s_ref already holds input_to_state + both biases, gate-permuted
            gates = i2s_ref[r] + jnp.dot(hcat, ws,
                                         preferred_element_type=jnp.float32)
            f_g = jax.nn.sigmoid(gates[:, 0 * F:1 * F])
            i_g = jax.nn.sigmoid(gates[:, 1 * F:2 * F])
            o_g = jax.nn.sigmoid(gates[:, 2 * F:3 * F])
            g_g = jnp.tanh(gates[:, 3 * F:4 * F])

            c_new = f_g * c_ref[...] + i_g * g_g              # (Bt*W, F)
            h_new = o_g * jnp.tanh(c_new)

            c_ref[...] = c_new
            hpad_ref[:, 1:W + 1, :] = h_new.reshape(Bt, W, F)  # in-place store
            out_ref[r] = h_new
            return carry

        lax.fori_loop(0, rows, row_step, 0, unroll=True)

    return kernel


# ----------------------------------------------------------------------------
# Wrapper: layout plumbing + the hoisted input_to_state matmul in plain JAX,
# the serial row recurrence in Pallas.
# ----------------------------------------------------------------------------
def pixel_rnn_layer(x, w_i2s_masked, b_i2s, w_s2s, b_s2s, out_features,
                    rgb_input=True, batch_tiles=1, max_rows_per_block=8):
    B, C_in, H, W = x.shape
    F = out_features
    O = 4 * F
    assert B % batch_tiles == 0, "batch_tiles must divide the batch"
    Bt = B // batch_tiles
    if batch_tiles > 1:
        # needed so the (Bt*W, ·) block dims stay sublane-aligned
        assert (Bt * W) % 8 == 0, "batch tiling needs (Bt*W) % 8 == 0"

    perm = _gate_perm(F, rgb_input)

    # ---- weights / biases -> matmul-friendly, gate-permuted layouts --------
    # input_to_state: (O, C_in, 1, 3) -> (3*C_in, O), row index = k*C_in + c
    wi_cat = jnp.transpose(w_i2s_masked[:, :, 0, :], (2, 1, 0)).reshape(3 * C_in, O)
    wi_cat = wi_cat[:, perm]
    # state_to_state: (O, F, 3) -> (3*F, O), row index = k*F + f
    ws_cat = jnp.transpose(w_s2s, (2, 1, 0)).reshape(3 * F, O)[:, perm]
    # both biases combined once, permuted, and folded into the i2s precompute
    bias = (b_i2s + b_s2s)[perm]

    # ---- hoisted input_to_state: one batched matmul over ALL rows ----------
    xp = jnp.pad(x, ((0, 0), (0, 0), (0, 0), (1, 1)))         # (B, C, H, W+2)
    xcat = jnp.concatenate([xp[..., k:k + W] for k in range(3)], axis=1)
    xrows = jnp.transpose(xcat, (2, 0, 3, 1)).reshape(H, B * W, 3 * C_in)
    i2s = jnp.einsum("hnc,co->hno", xrows, wi_cat,
                     precision=jax.lax.Precision.HIGHEST) + bias   # (H, B*W, O)
    i2s = i2s.astype(jnp.float32)

    rows = _pick_rows_per_block(H, max_rows_per_block)
    grid = (batch_tiles, H // rows)

    kernel = make_kernel(Bt, W, F, O, rows)

    out = pl.pallas_call(
        kernel,
        out_shape=jax.ShapeDtypeStruct((H, B * W, F), jnp.float32),
        grid_spec=pltpu.PrefetchScalarGridSpec(
            num_scalar_prefetch=0,
            grid=grid,
            in_specs=[
                pl.BlockSpec((rows, Bt * W, O), lambda bt, rb: (rb, bt, 0)),
                pl.BlockSpec((3 * F, O), lambda bt, rb: (0, 0)),
            ],
            out_specs=pl.BlockSpec((rows, Bt * W, F), lambda bt, rb: (rb, bt, 0)),
            scratch_shapes=[
                pltpu.VMEM((Bt, W + 2, F), jnp.float32),   # padded hidden row
                pltpu.VMEM((Bt * W, F), jnp.float32),      # cell state
            ],
        ),
        compiler_params=pltpu.CompilerParams(
            # batch tiles are independent (second TC on v7x); rows are serial
            dimension_semantics=("parallel", "arbitrary")),
    )(i2s, ws_cat)

    # (H, B*W, F) -> (B, F, H, W)   (PyTorch output convention)
    return jnp.transpose(out.reshape(H, B, W, F), (1, 3, 0, 2))


# ----------------------------------------------------------------------------
# Pure-JAX reference (mirrors the PyTorch forward) for verification.
# ----------------------------------------------------------------------------
def reference_forward(x, w_i2s_masked, b_i2s, w_s2s, b_s2s, out_features,
                      rgb_input=True):
    B, C_in, H, W = x.shape
    F_out = out_features
    O = 4 * F_out
    hi = jax.lax.Precision.HIGHEST

    i2s = jax.lax.conv_general_dilated(
        x, w_i2s_masked, (1, 1), [(0, 0), (1, 1)],
        dimension_numbers=("NCHW", "OIHW", "NCHW"),
        precision=hi) + b_i2s[None, :, None, None]

    w4 = w_s2s[:, :, None, :]
    h = jnp.zeros((B, F_out, W), jnp.float32)
    c = jnp.zeros((B, F_out, W), jnp.float32)
    rows = []
    for i in range(H):
        s2s = jax.lax.conv_general_dilated(
            h[:, :, None, :], w4, (1, 1), [(0, 0), (1, 1)],
            dimension_numbers=("NCHW", "OIHW", "NCHW"),
            precision=hi)[:, :, 0, :] + b_s2s[None, :, None]
        gates = s2s + i2s[:, :, i, :]
        if rgb_input:
            G, g4 = O // 3, F_out // 3

            def pick(j):
                return jnp.concatenate(
                    [gates[:, clr * G + j * g4: clr * G + (j + 1) * g4]
                     for clr in range(3)], axis=1)

            f_, i_, o_, g_ = pick(0), pick(1), pick(2), pick(3)
        else:
            f_ = gates[:, 0 * F_out:1 * F_out]
            i_ = gates[:, 1 * F_out:2 * F_out]
            o_ = gates[:, 2 * F_out:3 * F_out]
            g_ = gates[:, 3 * F_out:4 * F_out]
        c = jax.nn.sigmoid(f_) * c + jax.nn.sigmoid(i_) * jnp.tanh(g_)
        h = jax.nn.sigmoid(o_) * jnp.tanh(c)
        rows.append(h)
    return jnp.stack(rows, axis=-2)


if __name__ == "__main__":
    # Small, mask-friendly sizes: in_features and out_features divisible by 3
    # (the rgb gate regrouping in the reference module requires it).
    B, C_in, H, W = 2, 6, 8, 16
    F_out = 12
    O = 4 * F_out

    key = jax.random.PRNGKey(0)
    k1, k2, k3, k4, k5 = jax.random.split(key, 5)
    w_i2s = jax.random.normal(k1, (O, C_in, 1, 3), jnp.float32) * 0.1
    b_i2s = jax.random.normal(k2, (O,), jnp.float32) * 0.1
    w_s2s = jax.random.normal(k3, (O, F_out, 3), jnp.float32) * 0.1
    b_s2s = jax.random.normal(k4, (O,), jnp.float32) * 0.1
    x = jax.random.normal(k5, (B, C_in, H, W), jnp.float32)

    # apply the PixelRNN 'B' mask to the input_to_state weights (param setup)
    mask = make_mask(O, C_in, 1, 3, mask_type="B")
    w_i2s_masked = w_i2s * mask

    fwd = jax.jit(functools.partial(pixel_rnn_layer, out_features=F_out,
                                    rgb_input=True))
    out = jax.block_until_ready(fwd(x, w_i2s_masked, b_i2s, w_s2s, b_s2s))

    ref = jax.block_until_ready(
        reference_forward(x, w_i2s_masked, b_i2s, w_s2s, b_s2s, F_out))

    assert out.shape == (B, F_out, H, W), out.shape
    assert np.allclose(np.asarray(out), np.asarray(ref), atol=2e-3, rtol=2e-3)
    print("KERNEL_OK")
</pallas_src>

<mosaic_0001>
module attributes {stable_mosaic.version = 11 : i64} {
  func.func @kernel(%arg0: i32, %arg1: i32, %arg2: memref<8x32x48xf32, #tpu.memory_space<vmem>>, %arg3: memref<36x48xf32, #tpu.memory_space<vmem>>, %arg4: memref<8x32x12xf32, #tpu.memory_space<vmem>>, %arg5: memref<2x18x12xf32, #tpu.memory_space<vmem>>, %arg6: memref<32x12xf32, #tpu.memory_space<vmem>>) attributes {dimension_semantics = [#tpu.dimension_semantics<parallel>, #tpu.dimension_semantics<arbitrary>], iteration_bounds = array<i64: 1, 1>, scalar_prefetch = 0 : i64, scratch_operands = 2 : i64, tpu.core_type = #tpu.core_type<tc>, window_params = [{transform_indices = @transform_0, window_bounds = array<i64: 8, 32, 48>}, {pipeline_mode = #tpu.pipeline_mode<synchronous>, transform_indices = @transform_1, window_bounds = array<i64: 36, 48>}, {transform_indices = @transform_2, window_bounds = array<i64: 8, 32, 12>}]} {
    %c0_i32 = arith.constant 0 : i32
    %0 = arith.cmpi eq, %arg1, %c0_i32 : i32
    %1 = arith.extui %0 : i1 to i32
    %c0_i32_0 = arith.constant 0 : i32
    %2 = arith.cmpi ne, %1, %c0_i32_0 : i32
    scf.if %2 {
      %cst_145 = arith.constant 0.000000e+00 : f32
      %356 = vector.broadcast %cst_145 : f32 to vector<2x18x12xf32>
      %c0_146 = arith.constant 0 : index
      %c0_147 = arith.constant 0 : index
      %c0_148 = arith.constant 0 : index
      %357 = vector.load %arg5[%c0_146, %c0_147, %c0_148] : memref<2x18x12xf32, #tpu.memory_space<vmem>>, vector<2x18x12xf32>
      tpu.vector_store %arg5[%c0_146, %c0_147, %c0_148], %356 {strides = array<i32>} : memref<2x18x12xf32, #tpu.memory_space<vmem>>, vector<2x18x12xf32>,
      %cst_149 = arith.constant 0.000000e+00 : f32
      %358 = vector.broadcast %cst_149 : f32 to vector<32x12xf32>
      %c0_150 = arith.constant 0 : index
      %c0_151 = arith.constant 0 : index
      %359 = vector.load %arg6[%c0_150, %c0_151] : memref<32x12xf32, #tpu.memory_space<vmem>>, vector<32x12xf32>
      tpu.vector_store %arg6[%c0_150, %c0_151], %358 {strides = array<i32>} : memref<32x12xf32, #tpu.memory_space<vmem>>, vector<32x12xf32>,
    } else {
    }
    %c0 = arith.constant 0 : index
    %c0_1 = arith.constant 0 : index
    %3 = vector.load %arg3[%c0, %c0_1] : memref<36x48xf32, #tpu.memory_space<vmem>>, vector<36x48xf32>
    %c0_i32_2 = arith.constant 0 : i32
    %c0_3 = arith.constant 0 : index
    %c0_4 = arith.constant 0 : index
    %c0_5 = arith.constant 0 : index
    %4 = vector.load %arg5[%c0_3, %c0_4, %c0_5] : memref<2x18x12xf32, #tpu.memory_space<vmem>>, vector<2x18x12xf32>
    %5 = vector.extract_strided_slice %4 {offsets = [0, 0, 0], sizes = [2, 16, 12], strides = [1, 1, 1]} : vector<2x18x12xf32> to vector<2x16x12xf32>
    %6 = vector.extract_strided_slice %4 {offsets = [0, 1, 0], sizes = [2, 16, 12], strides = [1, 1, 1]} : vector<2x18x12xf32> to vector<2x16x12xf32>
    %7 = vector.extract_strided_slice %4 {offsets = [0, 2, 0], sizes = [2, 16, 12], strides = [1, 1, 1]} : vector<2x18x12xf32> to vector<2x16x12xf32>
    %8 = tpu.concatenate %5, %6, %7 in 2 : vector<2x16x12xf32>, vector<2x16x12xf32>, vector<2x16x12xf32> -> vector<2x16x36xf32>
    %9 = vector.shape_cast %8 : vector<2x16x36xf32> to vector<32x36xf32>
    %10 = arith.index_cast %c0_i32_2 : i32 to index
    %c0_6 = arith.constant 0 : index
    %c0_7 = arith.constant 0 : index
    %11 = vector.load %arg2[%10, %c0_6, %c0_7] : memref<8x32x48xf32, #tpu.memory_space<vmem>>, vector<1x32x48xf32>
    %12 = vector.shape_cast %11 : vector<1x32x48xf32> to vector<32x48xf32>
    %cst = arith.constant dense<0.000000e+00> : vector<32x48xf32>
    %13 = tpu.matmul %9, %3, %cst {dimension_numbers = #tpu.dot_dimension_numbers<[1], [0], [0], [1], [0, 0, 1, 1], [], []>} : vector<32x36xf32>, vector<36x48xf32>, vector<32x48xf32> -> vector<32x48xf32>
    %14 = arith.addf %12, %13 : vector<32x48xf32>
    %15 = vector.extract_strided_slice %14 {offsets = [0, 0], sizes = [32, 12], strides = [1, 1]} : vector<32x48xf32> to vector<32x12xf32>
    %16 = arith.negf %15 : vector<32x12xf32>
    %17 = math.exp %16 : vector<32x12xf32>
    %cst_8 = arith.constant 1.000000e+00 : f32
    %18 = vector.broadcast %cst_8 : f32 to vector<32x12xf32>
    %19 = arith.addf %18, %17 : vector<32x12xf32>
    %20 = arith.divf %18, %19 : vector<32x12xf32>
    %21 = vector.extract_strided_slice %14 {offsets = [0, 12], sizes = [32, 12], strides = [1, 1]} : vector<32x48xf32> to vector<32x12xf32>
    %22 = arith.negf %21 : vector<32x12xf32>
    %23 = math.exp %22 : vector<32x12xf32>
    %cst_9 = arith.constant 1.000000e+00 : f32
    %24 = vector.broadcast %cst_9 : f32 to vector<32x12xf32>
    %25 = arith.addf %24, %23 : vector<32x12xf32>
    %26 = arith.divf %24, %25 : vector<32x12xf32>
    %27 = vector.extract_strided_slice %14 {offsets = [0, 24], sizes = [32, 12], strides = [1, 1]} : vector<32x48xf32> to vector<32x12xf32>
    %28 = arith.negf %27 : vector<32x12xf32>
    %29 = math.exp %28 : vector<32x12xf32>
    %cst_10 = arith.constant 1.000000e+00 : f32
    %30 = vector.broadcast %cst_10 : f32 to vector<32x12xf32>
    %31 = arith.addf %30, %29 : vector<32x12xf32>
    %32 = arith.divf %30, %31 : vector<32x12xf32>
    %33 = vector.extract_strided_slice %14 {offsets = [0, 36], sizes = [32, 12], strides = [1, 1]} : vector<32x48xf32> to vector<32x12xf32>
    %34 = math.tanh %33 : vector<32x12xf32>
    %c0_11 = arith.constant 0 : index
    %c0_12 = arith.constant 0 : index
    %35 = vector.load %arg6[%c0_11, %c0_12] : memref<32x12xf32, #tpu.memory_space<vmem>>, vector<32x12xf32>
    %36 = arith.mulf %20, %35 : vector<32x12xf32>
    %37 = arith.mulf %26, %34 : vector<32x12xf32>
    %38 = arith.addf %36, %37 : vector<32x12xf32>
    %39 = math.tanh %38 : vector<32x12xf32>
    %40 = arith.mulf %32, %39 : vector<32x12xf32>
    %c0_13 = arith.constant 0 : index
    %c0_14 = arith.constant 0 : index
    %41 = vector.load %arg6[%c0_13, %c0_14] : memref<32x12xf32, #tpu.memory_space<vmem>>, vector<32x12xf32>
    tpu.vector_store %arg6[%c0_13, %c0_14], %38 {strides = array<i32>} : memref<32x12xf32, #tpu.memory_space<vmem>>, vector<32x12xf32>,
    %42 = vector.shape_cast %40 : vector<32x12xf32> to vector<2x16x12xf32>
    %c0_15 = arith.constant 0 : index
    %c1 = arith.constant 1 : index
    %c0_16 = arith.constant 0 : index
    %43 = vector.load %arg5[%c0_15, %c1, %c0_16] : memref<2x18x12xf32, #tpu.memory_space<vmem>>, vector<2x16x12xf32>
    tpu.vector_store %arg5[%c0_15, %c1, %c0_16], %42 {strides = array<i32>} : memref<2x18x12xf32, #tpu.memory_space<vmem>>, vector<2x16x12xf32>,
    %44 = arith.index_cast %c0_i32_2 : i32 to index
    %c0_17 = arith.constant 0 : index
    %c0_18 = arith.constant 0 : index
    %45 = vector.load %arg4[%44, %c0_17, %c0_18] : memref<8x32x12xf32, #tpu.memory_space<vmem>>, vector<1x32x12xf32>
    %46 = vector.shape_cast %45 : vector<1x32x12xf32> to vector<32x12xf32>
    %47 = vector.shape_cast %40 : vector<32x12xf32> to vector<1x32x12xf32>
    tpu.vector_store %arg4[%44, %c0_17, %c0_18], %47 {strides = array<i32>} : memref<8x32x12xf32, #tpu.memory_space<vmem>>, vector<1x32x12xf32>,
    %c1_i32 = arith.constant 1 : i32
    %c0_19 = arith.constant 0 : index
    %c0_20 = arith.constant 0 : index
    %c0_21 = arith.constant 0 : index
    %48 = vector.load %arg5[%c0_19, %c0_20, %c0_21] : memref<2x18x12xf32, #tpu.memory_space<vmem>>, vector<2x18x12xf32>
    %49 = vector.extract_strided_slice %48 {offsets = [0, 0, 0], sizes = [2, 16, 12], strides = [1, 1, 1]} : vector<2x18x12xf32> to vector<2x16x12xf32>
    %50 = vector.extract_strided_slice %48 {offsets = [0, 1, 0], sizes = [2, 16, 12], strides = [1, 1, 1]} : vector<2x18x12xf32> to vector<2x16x12xf32>
    %51 = vector.extract_strided_slice %48 {offsets = [0, 2, 0], sizes = [2, 16, 12], strides = [1, 1, 1]} : vector<2x18x12xf32> to vector<2x16x12xf32>
    %52 = tpu.concatenate %49, %50, %51 in 2 : vector<2x16x12xf32>, vector<2x16x12xf32>, vector<2x16x12xf32> -> vector<2x16x36xf32>
    %53 = vector.shape_cast %52 : vector<2x16x36xf32> to vector<32x36xf32>
    %54 = arith.index_cast %c1_i32 : i32 to index
    %c0_22 = arith.constant 0 : index
    %c0_23 = arith.constant 0 : index
    %55 = vector.load %arg2[%54, %c0_22, %c0_23] : memref<8x32x48xf32, #tpu.memory_space<vmem>>, vector<1x32x48xf32>
    %56 = vector.shape_cast %55 : vector<1x32x48xf32> to vector<32x48xf32>
    %cst_24 = arith.constant dense<0.000000e+00> : vector<32x48xf32>
    %57 = tpu.matmul %53, %3, %cst_24 {dimension_numbers = #tpu.dot_dimension_numbers<[1], [0], [0], [1], [0, 0, 1, 1], [], []>} : vector<32x36xf32>, vector<36x48xf32>, vector<32x48xf32> -> vector<32x48xf32>
    %58 = arith.addf %56, %57 : vector<32x48xf32>
    %59 = vector.extract_strided_slice %58 {offsets = [0, 0], sizes = [32, 12], strides = [1, 1]} : vector<32x48xf32> to vector<32x12xf32>
    %60 = arith.negf %59 : vector<32x12xf32>
    %61 = math.exp %60 : vector<32x12xf32>
    %cst_25 = arith.constant 1.000000e+00 : f32
    %62 = vector.broadcast %cst_25 : f32 to vector<32x12xf32>
    %63 = arith.addf %62, %61 : vector<32x12xf32>
    %64 = arith.divf %62, %63 : vector<32x12xf32>
    %65 = vector.extract_strided_slice %58 {offsets = [0, 12], sizes = [32, 12], strides = [1, 1]} : vector<32x48xf32> to vector<32x12xf32>
    %66 = arith.negf %65 : vector<32x12xf32>
    %67 = math.exp %66 : vector<32x12xf32>
    %cst_26 = arith.constant 1.000000e+00 : f32
    %68 = vector.broadcast %cst_26 : f32 to vector<32x12xf32>
    %69 = arith.addf %68, %67 : vector<32x12xf32>
    %70 = arith.divf %68, %69 : vector<32x12xf32>
    %71 = vector.extract_strided_slice %58 {offsets = [0, 24], sizes = [32, 12], strides = [1, 1]} : vector<32x48xf32> to vector<32x12xf32>
    %72 = arith.negf %71 : vector<32x12xf32>
    %73 = math.exp %72 : vector<32x12xf32>
    %cst_27 = arith.constant 1.000000e+00 : f32
    %74 = vector.broadcast %cst_27 : f32 to vector<32x12xf32>
    %75 = arith.addf %74, %73 : vector<32x12xf32>
    %76 = arith.divf %74, %75 : vector<32x12xf32>
    %77 = vector.extract_strided_slice %58 {offsets = [0, 36], sizes = [32, 12], strides = [1, 1]} : vector<32x48xf32> to vector<32x12xf32>
    %78 = math.tanh %77 : vector<32x12xf32>
    %c0_28 = arith.constant 0 : index
    %c0_29 = arith.constant 0 : index
    %79 = vector.load %arg6[%c0_28, %c0_29] : memref<32x12xf32, #tpu.memory_space<vmem>>, vector<32x12xf32>
    %80 = arith.mulf %64, %79 : vector<32x12xf32>
    %81 = arith.mulf %70, %78 : vector<32x12xf32>
    %82 = arith.addf %80, %81 : vector<32x12xf32>
    %83 = math.tanh %82 : vector<32x12xf32>
    %84 = arith.mulf %76, %83 : vector<32x12xf32>
    %c0_30 = arith.constant 0 : index
    %c0_31 = arith.constant 0 : index
    %85 = vector.load %arg6[%c0_30, %c0_31] : memref<32x12xf32, #tpu.memory_space<vmem>>, vector<32x12xf32>
    tpu.vector_store %arg6[%c0_30, %c0_31], %82 {strides = array<i32>} : memref<32x12xf32, #tpu.memory_space<vmem>>, vector<32x12xf32>,
    %86 = vector.shape_cast %84 : vector<32x12xf32> to vector<2x16x12xf32>
    %c0_32 = arith.constant 0 : index
    %c1_33 = arith.constant 1 : index
    %c0_34 = arith.constant 0 : index
    %87 = vector.load %arg5[%c0_32, %c1_33, %c0_34] : memref<2x18x12xf32, #tpu.memory_space<vmem>>, vector<2x16x12xf32>
    tpu.vector_store %arg5[%c0_32, %c1_33, %c0_34], %86 {strides = array<i32>} : memref<2x18x12xf32, #tpu.memory_space<vmem>>, vector<2x16x12xf32>,
    %88 = arith.index_cast %c1_i32 : i32 to index
    %c0_35 = arith.constant 0 : index
    %c0_36 = arith.constant 0 : index
    %89 = vector.load %arg4[%88, %c0_35, %c0_36] : memref<8x32x12xf32, #tpu.memory_space<vmem>>, vector<1x32x12xf32>
    %90 = vector.shape_cast %89 : vector<1x32x12xf32> to vector<32x12xf32>
    %91 = vector.shape_cast %84 : vector<32x12xf32> to vector<1x32x12xf32>
    tpu.vector_store %arg4[%88, %c0_35, %c0_36], %91 {strides = array<i32>} : memref<8x32x12xf32, #tpu.memory_space<vmem>>, vector<1x32x12xf32>,
    %c2_i32 = arith.constant 2 : i32
    %c0_37 = arith.constant 0 : index
    %c0_38 = arith.constant 0 : index
    %c0_39 = arith.constant 0 : index
    %92 = vector.load %arg5[%c0_37, %c0_38, %c0_39] : memref<2x18x12xf32, #tpu.memory_space<vmem>>, vector<2x18x12xf32>
    %93 = vector.extract_strided_slice %92 {offsets = [0, 0, 0], sizes = [2, 16, 12], strides = [1, 1, 1]} : vector<2x18x12xf32> to vector<2x16x12xf32>
    %94 = vector.extract_strided_slice %92 {offsets = [0, 1, 0], sizes = [2, 16, 12], strides = [1, 1, 1]} : vector<2x18x12xf32> to vector<2x16x12xf32>
    %95 = vector.extract_strided_slice %92 {offsets = [0, 2, 0], sizes = [2, 16, 12], strides = [1, 1, 1]} : vector<2x18x12xf32> to vector<2x16x12xf32>
    %96 = tpu.concatenate %93, %94, %95 in 2 : vector<2x16x12xf32>, vector<2x16x12xf32>, vector<2x16x12xf32> -> vector<2x16x36xf32>
    %97 = vector.shape_cast %96 : vector<2x16x36xf32> to vector<32x36xf32>
    %98 = arith.index_cast %c2_i32 : i32 to index
    %c0_40 = arith.constant 0 : index
    %c0_41 = arith.constant 0 : index
    %99 = vector.load %arg2[%98, %c0_40, %c0_41] : memref<8x32x48xf32, #tpu.memory_space<vmem>>, vector<1x32x48xf32>
    %100 = vector.shape_cast %99 : vector<1x32x48xf32> to vector<32x48xf32>
    %cst_42 = arith.constant dense<0.000000e+00> : vector<32x48xf32>
    %101 = tpu.matmul %97, %3, %cst_42 {dimension_numbers = #tpu.dot_dimension_numbers<[1], [0], [0], [1], [0, 0, 1, 1], [], []>} : vector<32x36xf32>, vector<36x48xf32>, vector<32x48xf32> -> vector<32x48xf32>
    %102 = arith.addf %100, %101 : vector<32x48xf32>
    %103 = vector.extract_strided_slice %102 {offsets = [0, 0], sizes = [32, 12], strides = [1, 1]} : vector<32x48xf32> to vector<32x12xf32>
    %104 = arith.negf %103 : vector<32x12xf32>
    %105 = math.exp %104 : vector<32x12xf32>
    %cst_43 = arith.constant 1.000000e+00 : f32
    %106 = vector.broadcast %cst_43 : f32 to vector<32x12xf32>
    %107 = arith.addf %106, %105 : vector<32x12xf32>
    %108 = arith.divf %106, %107 : vector<32x12xf32>
    %109 = vector.extract_strided_slice %102 {offsets = [0, 12], sizes = [32, 12], strides = [1, 1]} : vector<32x48xf32> to vector<32x12xf32>
    %110 = arith.negf %109 : vector<32x12xf32>
    %111 = math.exp %110 : vector<32x12xf32>
    %cst_44 = arith.constant 1.000000e+00 : f32
    %112 = vector.broadcast %cst_44 : f32 to vector<32x12xf32>
    %113 = arith.addf %112, %111 : vector<32x12xf32>
    %114 = arith.divf %112, %113 : vector<32x12xf32>
    %115 = vector.extract_strided_slice %102 {offsets = [0, 24], sizes = [32, 12], strides = [1, 1]} : vector<32x48xf32> to vector<32x12xf32>
    %116 = arith.negf %115 : vector<32x12xf32>
    %117 = math.exp %116 : vector<32x12xf32>
    %cst_45 = arith.constant 1.000000e+00 : f32
    %118 = vector.broadcast %cst_45 : f32 to vector<32x12xf32>
    %119 = arith.addf %118, %117 : vector<32x12xf32>
    %120 = arith.divf %118, %119 : vector<32x12xf32>
    %121 = vector.extract_strided_slice %102 {offsets = [0, 36], sizes = [32, 12], strides = [1, 1]} : vector<32x48xf32> to vector<32x12xf32>
    %122 = math.tanh %121 : vector<32x12xf32>
    %c0_46 = arith.constant 0 : index
    %c0_47 = arith.constant 0 : index
    %123 = vector.load %arg6[%c0_46, %c0_47] : memref<32x12xf32, #tpu.memory_space<vmem>>, vector<32x12xf32>
    %124 = arith.mulf %108, %123 : vector<32x12xf32>
    %125 = arith.mulf %114, %122 : vector<32x12xf32>
    %126 = arith.addf %124, %125 : vector<32x12xf32>
    %127 = math.tanh %126 : vector<32x12xf32>
    %128 = arith.mulf %120, %127 : vector<32x12xf32>
    %c0_48 = arith.constant 0 : index
    %c0_49 = arith.constant 0 : index
    %129 = vector.load %arg6[%c0_48, %c0_49] : memref<32x12xf32, #tpu.memory_space<vmem>>, vector<32x12xf32>
    tpu.vector_store %arg6[%c0_48, %c0_49], %126 {strides = array<i32>} : memref<32x12xf32, #tpu.memory_space<vmem>>, vector<32x12xf32>,
    %130 = vector.shape_cast %128 : vector<32x12xf32> to vector<2x16x12xf32>
    %c0_50 = arith.constant 0 : index
    %c1_51 = arith.constant 1 : index
    %c0_52 = arith.constant 0 : index
    %131 = vector.load %arg5[%c0_50, %c1_51, %c0_52] : memref<2x18x12xf32, #tpu.memory_space<vmem>>, vector<2x16x12xf32>
    tpu.vector_store %arg5[%c0_50, %c1_51, %c0_52], %130 {strides = array<i32>} : memref<2x18x12xf32, #tpu.memory_space<vmem>>, vector<2x16x12xf32>,
    %132 = arith.index_cast %c2_i32 : i32 to index
    %c0_53 = arith.constant 0 : index
    %c0_54 = arith.constant 0 : index
    %133 = vector.load %arg4[%132, %c0_53, %c0_54] : memref<8x32x12xf32, #tpu.memory_space<vmem>>, vector<1x32x12xf32>
    %134 = vector.shape_cast %133 : vector<1x32x12xf32> to vector<32x12xf32>
    %135 = vector.shape_cast %128 : vector<32x12xf32> to vector<1x32x12xf32>
    tpu.vector_store %arg4[%132, %c0_53, %c0_54], %135 {strides = array<i32>} : memref<8x32x12xf32, #tpu.memory_space<vmem>>, vector<1x32x12xf32>,
    %c3_i32 = arith.constant 3 : i32
    %c0_55 = arith.constant 0 : index
    %c0_56 = arith.constant 0 : index
    %c0_57 = arith.constant 0 : index
    %136 = vector.load %arg5[%c0_55, %c0_56, %c0_57] : memref<2x18x12xf32, #tpu.memory_space<vmem>>, vector<2x18x12xf32>
    %137 = vector.extract_strided_slice %136 {offsets = [0, 0, 0], sizes = [2, 16, 12], strides = [1, 1, 1]} : vector<2x18x12xf32> to vector<2x16x12xf32>
    %138 = vector.extract_strided_slice %136 {offsets = [0, 1, 0], sizes = [2, 16, 12], strides = [1, 1, 1]} : vector<2x18x12xf32> to vector<2x16x12xf32>
    %139 = vector.extract_strided_slice %136 {offsets = [0, 2, 0], sizes = [2, 16, 12], strides = [1, 1, 1]} : vector<2x18x12xf32> to vector<2x16x12xf32>
    %140 = tpu.concatenate %137, %138, %139 in 2 : vector<2x16x12xf32>, vector<2x16x12xf32>, vector<2x16x12xf32> -> vector<2x16x36xf32>
    %141 = vector.shape_cast %140 : vector<2x16x36xf32> to vector<32x36xf32>
    %142 = arith.index_cast %c3_i32 : i32 to index
    %c0_58 = arith.constant 0 : index
    %c0_59 = arith.constant 0 : index
    %143 = vector.load %arg2[%142, %c0_58, %c0_59] : memref<8x32x48xf32, #tpu.memory_space<vmem>>, vector<1x32x48xf32>
    %144 = vector.shape_cast %143 : vector<1x32x48xf32> to vector<32x48xf32>
    %cst_60 = arith.constant dense<0.000000e+00> : vector<32x48xf32>
    %145 = tpu.matmul %141, %3, %cst_60 {dimension_numbers = #tpu.dot_dimension_numbers<[1], [0], [0], [1], [0, 0, 1, 1], [], []>} : vector<32x36xf32>, vector<36x48xf32>, vector<32x48xf32> -> vector<32x48xf32>
    %146 = arith.addf %144, %145 : vector<32x48xf32>
    %147 = vector.extract_strided_slice %146 {offsets = [0, 0], sizes = [32, 12], strides = [1, 1]} : vector<32x48xf32> to vector<32x12xf32>
    %148 = arith.negf %147 : vector<32x12xf32>
    %149 = math.exp %148 : vector<32x12xf32>
    %cst_61 = arith.constant 1.000000e+00 : f32
    %150 = vector.broadcast %cst_61 : f32 to vector<32x12xf32>
    %151 = arith.addf %150, %149 : vector<32x12xf32>
    %152 = arith.divf %150, %151 : vector<32x12xf32>
    %153 = vector.extract_strided_slice %146 {offsets = [0, 12], sizes = [32, 12], strides = [1, 1]} : vector<32x48xf32> to vector<32x12xf32>
    %154 = arith.negf %153 : vector<32x12xf32>
    %155 = math.exp %154 : vector<32x12xf32>
    %cst_62 = arith.constant 1.000000e+00 : f32
    %156 = vector.broadcast %cst_62 : f32 to vector<32x12xf32>
    %157 = arith.addf %156, %155 : vector<32x12xf32>
    %158 = arith.divf %156, %157 : vector<32x12xf32>
    %159 = vector.extract_strided_slice %146 {offsets = [0, 24], sizes = [32, 12], strides = [1, 1]} : vector<32x48xf32> to vector<32x12xf32>
    %160 = arith.negf %159 : vector<32x12xf32>
    %161 = math.exp %160 : vector<32x12xf32>
    %cst_63 = arith.constant 1.000000e+00 : f32
    %162 = vector.broadcast %cst_63 : f32 to vector<32x12xf32>
    %163 = arith.addf %162, %161 : vector<32x12xf32>
    %164 = arith.divf %162, %163 : vector<32x12xf32>
    %165 = vector.extract_strided_slice %146 {offsets = [0, 36], sizes = [32, 12], strides = [1, 1]} : vector<32x48xf32> to vector<32x12xf32>
    %166 = math.tanh %165 : vector<32x12xf32>
    %c0_64 = arith.constant 0 : index
    %c0_65 = arith.constant 0 : index
    %167 = vector.load %arg6[%c0_64, %c0_65] : memref<32x12xf32, #tpu.memory_space<vmem>>, vector<32x12xf32>
    %168 = arith.mulf %152, %167 : vector<32x12xf32>
    %169 = arith.mulf %158, %166 : vector<32x12xf32>
    %170 = arith.addf %168, %169 : vector<32x12xf32>
    %171 = math.tanh %170 : vector<32x12xf32>
    %172 = arith.mulf %164, %171 : vector<32x12xf32>
    %c0_66 = arith.constant 0 : index
    %c0_67 = arith.constant 0 : index
    %173 = vector.load %arg6[%c0_66, %c0_67] : memref<32x12xf32, #tpu.memory_space<vmem>>, vector<32x12xf32>
    tpu.vector_store %arg6[%c0_66, %c0_67], %170 {strides = array<i32>} : memref<32x12xf32, #tpu.memory_space<vmem>>, vector<32x12xf32>,
    %174 = vector.shape_cast %172 : vector<32x12xf32> to vector<2x16x12xf32>
    %c0_68 = arith.constant 0 : index
    %c1_69 = arith.constant 1 : index
    %c0_70 = arith.constant 0 : index
    %175 = vector.load %arg5[%c0_68, %c1_69, %c0_70] : memref<2x18x12xf32, #tpu.memory_space<vmem>>, vector<2x16x12xf32>
    tpu.vector_store %arg5[%c0_68, %c1_69, %c0_70], %174 {strides = array<i32>} : memref<2x18x12xf32, #tpu.memory_space<vmem>>, vector<2x16x12xf32>,
    %176 = arith.index_cast %c3_i32 : i32 to index
    %c0_71 = arith.constant 0 : index
    %c0_72 = arith.constant 0 : index
    %177 = vector.load %arg4[%176, %c0_71, %c0_72] : memref<8x32x12xf32, #tpu.memory_space<vmem>>, vector<1x32x12xf32>
    %178 = vector.shape_cast %177 : vector<1x32x12xf32> to vector<32x12xf32>
    %179 = vector.shape_cast %172 : vector<32x12xf32> to vector<1x32x12xf32>
    tpu.vector_store %arg4[%176, %c0_71, %c0_72], %179 {strides = array<i32>} : memref<8x32x12xf32, #tpu.memory_space<vmem>>, vector<1x32x12xf32>,
    %c4_i32 = arith.constant 4 : i32
    %c0_73 = arith.constant 0 : index
    %c0_74 = arith.constant 0 : index
    %c0_75 = arith.constant 0 : index
    %180 = vector.load %arg5[%c0_73, %c0_74, %c0_75] : memref<2x18x12xf32, #tpu.memory_space<vmem>>, vector<2x18x12xf32>
    %181 = vector.extract_strided_slice %180 {offsets = [0, 0, 0], sizes = [2, 16, 12], strides = [1, 1, 1]} : vector<2x18x12xf32> to vector<2x16x12xf32>
    %182 = vector.extract_strided_slice %180 {offsets = [0, 1, 0], sizes = [2, 16, 12], strides = [1, 1, 1]} : vector<2x18x12xf32> to vector<2x16x12xf32>
    %183 = vector.extract_strided_slice %180 {offsets = [0, 2, 0], sizes = [2, 16, 12], strides = [1, 1, 1]} : vector<2x18x12xf32> to vector<2x16x12xf32>
    %184 = tpu.concatenate %181, %182, %183 in 2 : vector<2x16x12xf32>, vector<2x16x12xf32>, vector<2x16x12xf32> -> vector<2x16x36xf32>
    %185 = vector.shape_cast %184 : vector<2x16x36xf32> to vector<32x36xf32>
    %186 = arith.index_cast %c4_i32 : i32 to index
    %c0_76 = arith.constant 0 : index
    %c0_77 = arith.constant 0 : index
    %187 = vector.load %arg2[%186, %c0_76, %c0_77] : memref<8x32x48xf32, #tpu.memory_space<vmem>>, vector<1x32x48xf32>
    %188 = vector.shape_cast %187 : vector<1x32x48xf32> to vector<32x48xf32>
    %cst_78 = arith.constant dense<0.000000e+00> : vector<32x48xf32>
    %189 = tpu.matmul %185, %3, %cst_78 {dimension_numbers = #tpu.dot_dimension_numbers<[1], [0], [0], [1], [0, 0, 1, 1], [], []>} : vector<32x36xf32>, vector<36x48xf32>, vector<32x48xf32> -> vector<32x48xf32>
    %190 = arith.addf %188, %189 : vector<32x48xf32>
    %191 = vector.extract_strided_slice %190 {offsets = [0, 0], sizes = [32, 12], strides = [1, 1]} : vector<32x48xf32> to vector<32x12xf32>
    %192 = arith.negf %191 : vector<32x12xf32>
    %193 = math.exp %192 : vector<32x12xf32>
    %cst_79 = arith.constant 1.000000e+00 : f32
    %194 = vector.broadcast %cst_79 : f32 to vector<32x12xf32>
    %195 = arith.addf %194, %193 : vector<32x12xf32>
    %196 = arith.divf %194, %195 : vector<32x12xf32>
    %197 = vector.extract_strided_slice %190 {offsets = [0, 12], sizes = [32, 12], strides = [1, 1]} : vector<32x48xf32> to vector<32x12xf32>
    %198 = arith.negf %197 : vector<32x12xf32>
    %199 = math.exp %198 : vector<32x12xf32>
    %cst_80 = arith.constant 1.000000e+00 : f32
    %200 = vector.broadcast %cst_80 : f32 to vector<32x12xf32>
    %201 = arith.addf %200, %199 : vector<32x12xf32>
    %202 = arith.divf %200, %201 : vector<32x12xf32>
    %203 = vector.extract_strided_slice %190 {offsets = [0, 24], sizes = [32, 12], strides = [1, 1]} : vector<32x48xf32> to vector<32x12xf32>
    %204 = arith.negf %203 : vector<32x12xf32>
    %205 = math.exp %204 : vector<32x12xf32>
    %cst_81 = arith.constant 1.000000e+00 : f32
    %206 = vector.broadcast %cst_81 : f32 to vector<32x12xf32>
    %207 = arith.addf %206, %205 : vector<32x12xf32>
    %208 = arith.divf %206, %207 : vector<32x12xf32>
    %209 = vector.extract_strided_slice %190 {offsets = [0, 36], sizes = [32, 12], strides = [1, 1]} : vector<32x48xf32> to vector<32x12xf32>
    %210 = math.tanh %209 : vector<32x12xf32>
    %c0_82 = arith.constant 0 : index
    %c0_83 = arith.constant 0 : index
    %211 = vector.load %arg6[%c0_82, %c0_83] : memref<32x12xf32, #tpu.memory_space<vmem>>, vector<32x12xf32>
    %212 = arith.mulf %196, %211 : vector<32x12xf32>
    %213 = arith.mulf %202, %210 : vector<32x12xf32>
    %214 = arith.addf %212, %213 : vector<32x12xf32>
    %215 = math.tanh %214 : vector<32x12xf32>
    %216 = arith.mulf %208, %215 : vector<32x12xf32>
    %c0_84 = arith.constant 0 : index
    %c0_85 = arith.constant 0 : index
    %217 = vector.load %arg6[%c0_84, %c0_85] : memref<32x12xf32, #tpu.memory_space<vmem>>, vector<32x12xf32>
    tpu.vector_store %arg6[%c0_84, %c0_85], %214 {strides = array<i32>} : memref<32x12xf32, #tpu.memory_space<vmem>>, vector<32x12xf32>,
    %218 = vector.shape_cast %216 : vector<32x12xf32> to vector<2x16x12xf32>
    %c0_86 = arith.constant 0 : index
    %c1_87 = arith.constant 1 : index
    %c0_88 = arith.constant 0 : index
    %219 = vector.load %arg5[%c0_86, %c1_87, %c0_88] : memref<2x18x12xf32, #tpu.memory_space<vmem>>, vector<2x16x12xf32>
    tpu.vector_store %arg5[%c0_86, %c1_87, %c0_88], %218 {strides = array<i32>} : memref<2x18x12xf32, #tpu.memory_space<vmem>>, vector<2x16x12xf32>,
    %220 = arith.index_cast %c4_i32 : i32 to index
    %c0_89 = arith.constant 0 : index
    %c0_90 = arith.constant 0 : index
    %221 = vector.load %arg4[%220, %c0_89, %c0_90] : memref<8x32x12xf32, #tpu.memory_space<vmem>>, vector<1x32x12xf32>
    %222 = vector.shape_cast %221 : vector<1x32x12xf32> to vector<32x12xf32>
    %223 = vector.shape_cast %216 : vector<32x12xf32> to vector<1x32x12xf32>
    tpu.vector_store %arg4[%220, %c0_89, %c0_90], %223 {strides = array<i32>} : memref<8x32x12xf32, #tpu.memory_space<vmem>>, vector<1x32x12xf32>,
    %c5_i32 = arith.constant 5 : i32
    %c0_91 = arith.constant 0 : index
    %c0_92 = arith.constant 0 : index
    %c0_93 = arith.constant 0 : index
    %224 = vector.load %arg5[%c0_91, %c0_92, %c0_93] : memref<2x18x12xf32, #tpu.memory_space<vmem>>, vector<2x18x12xf32>
    %225 = vector.extract_strided_slice %224 {offsets = [0, 0, 0], sizes = [2, 16, 12], strides = [1, 1, 1]} : vector<2x18x12xf32> to vector<2x16x12xf32>
    %226 = vector.extract_strided_slice %224 {offsets = [0, 1, 0], sizes = [2, 16, 12], strides = [1, 1, 1]} : vector<2x18x12xf32> to vector<2x16x12xf32>
    %227 = vector.extract_strided_slice %224 {offsets = [0, 2, 0], sizes = [2, 16, 12], strides = [1, 1, 1]} : vector<2x18x12xf32> to vector<2x16x12xf32>
    %228 = tpu.concatenate %225, %226, %227 in 2 : vector<2x16x12xf32>, vector<2x16x12xf32>, vector<2x16x12xf32> -> vector<2x16x36xf32>
    %229 = vector.shape_cast %228 : vector<2x16x36xf32> to vector<32x36xf32>
    %230 = arith.index_cast %c5_i32 : i32 to index
    %c0_94 = arith.constant 0 : index
    %c0_95 = arith.constant 0 : index
    %231 = vector.load %arg2[%230, %c0_94, %c0_95] : memref<8x32x48xf32, #tpu.memory_space<vmem>>, vector<1x32x48xf32>
    %232 = vector.shape_cast %231 : vector<1x32x48xf32> to vector<32x48xf32>
    %cst_96 = arith.constant dense<0.000000e+00> : vector<32x48xf32>
    %233 = tpu.matmul %229, %3, %cst_96 {dimension_numbers = #tpu.dot_dimension_numbers<[1], [0], [0], [1], [0, 0, 1, 1], [], []>} : vector<32x36xf32>, vector<36x48xf32>, vector<32x48xf32> -> vector<32x48xf32>
    %234 = arith.addf %232, %233 : vector<32x48xf32>
    %235 = vector.extract_strided_slice %234 {offsets = [0, 0], sizes = [32, 12], strides = [1, 1]} : vector<32x48xf32> to vector<32x12xf32>
    %236 = arith.negf %235 : vector<32x12xf32>
    %237 = math.exp %236 : vector<32x12xf32>
    %cst_97 = arith.constant 1.000000e+00 : f32
    %238 = vector.broadcast %cst_97 : f32 to vector<32x12xf32>
    %239 = arith.addf %238, %237 : vector<32x12xf32>
    %240 = arith.divf %238, %239 : vector<32x12xf32>
    %241 = vector.extract_strided_slice %234 {offsets = [0, 12], sizes = [32, 12], strides = [1, 1]} : vector<32x48xf32> to vector<32x12xf32>
    %242 = arith.negf %241 : vector<32x12xf32>
    %243 = math.exp %242 : vector<32x12xf32>
    %cst_98 = arith.constant 1.000000e+00 : f32
    %244 = vector.broadcast %cst_98 : f32 to vector<32x12xf32>
    %245 = arith.addf %244, %243 : vector<32x12xf32>
    %246 = arith.divf %244, %245 : vector<32x12xf32>
    %247 = vector.extract_strided_slice %234 {offsets = [0, 24], sizes = [32, 12], strides = [1, 1]} : vector<32x48xf32> to vector<32x12xf32>
    %248 = arith.negf %247 : vector<32x12xf32>
    %249 = math.exp %248 : vector<32x12xf32>
    %cst_99 = arith.constant 1.000000e+00 : f32
    %250 = vector.broadcast %cst_99 : f32 to vector<32x12xf32>
    %251 = arith.addf %250, %249 : vector<32x12xf32>
    %252 = arith.divf %250, %251 : vector<32x12xf32>
    %253 = vector.extract_strided_slice %234 {offsets = [0, 36], sizes = [32, 12], strides = [1, 1]} : vector<32x48xf32> to vector<32x12xf32>
    %254 = math.tanh %253 : vector<32x12xf32>
    %c0_100 = arith.constant 0 : index
    %c0_101 = arith.constant 0 : index
    %255 = vector.load %arg6[%c0_100, %c0_101] : memref<32x12xf32, #tpu.memory_space<vmem>>, vector<32x12xf32>
    %256 = arith.mulf %240, %255 : vector<32x12xf32>
    %257 = arith.mulf %246, %254 : vector<32x12xf32>
    %258 = arith.addf %256, %257 : vector<32x12xf32>
    %259 = math.tanh %258 : vector<32x12xf32>
    %260 = arith.mulf %252, %259 : vector<32x12xf32>
    %c0_102 = arith.constant 0 : index
    %c0_103 = arith.constant 0 : index
    %261 = vector.load %arg6[%c0_102, %c0_103] : memref<32x12xf32, #tpu.memory_space<vmem>>, vector<32x12xf32>
    tpu.vector_store %arg6[%c0_102, %c0_103], %258 {strides = array<i32>} : memref<32x12xf32, #tpu.memory_space<vmem>>, vector<32x12xf32>,
    %262 = vector.shape_cast %260 : vector<32x12xf32> to vector<2x16x12xf32>
    %c0_104 = arith.constant 0 : index
    %c1_105 = arith.constant 1 : index
    %c0_106 = arith.constant 0 : index
    %263 = vector.load %arg5[%c0_104, %c1_105, %c0_106] : memref<2x18x12xf32, #tpu.memory_space<vmem>>, vector<2x16x12xf32>
    tpu.vector_store %arg5[%c0_104, %c1_105, %c0_106], %262 {strides = array<i32>} : memref<2x18x12xf32, #tpu.memory_space<vmem>>, vector<2x16x12xf32>,
    %264 = arith.index_cast %c5_i32 : i32 to index
    %c0_107 = arith.constant 0 : index
    %c0_108 = arith.constant 0 : index
    %265 = vector.load %arg4[%264, %c0_107, %c0_108] : memref<8x32x12xf32, #tpu.memory_space<vmem>>, vector<1x32x12xf32>
    %266 = vector.shape_cast %265 : vector<1x32x12xf32> to vector<32x12xf32>
    %267 = vector.shape_cast %260 : vector<32x12xf32> to vector<1x32x12xf32>
    tpu.vector_store %arg4[%264, %c0_107, %c0_108], %267 {strides = array<i32>} : memref<8x32x12xf32, #tpu.memory_space<vmem>>, vector<1x32x12xf32>,
    %c6_i32 = arith.constant 6 : i32
    %c0_109 = arith.constant 0 : index
    %c0_110 = arith.constant 0 : index
    %c0_111 = arith.constant 0 : index
    %268 = vector.load %arg5[%c0_109, %c0_110, %c0_111] : memref<2x18x12xf32, #tpu.memory_space<vmem>>, vector<2x18x12xf32>
    %269 = vector.extract_strided_slice %268 {offsets = [0, 0, 0], sizes = [2, 16, 12], strides = [1, 1, 1]} : vector<2x18x12xf32> to vector<2x16x12xf32>
    %270 = vector.extract_strided_slice %268 {offsets = [0, 1, 0], sizes = [2, 16, 12], strides = [1, 1, 1]} : vector<2x18x12xf32> to vector<2x16x12xf32>
    %271 = vector.extract_strided_slice %268 {offsets = [0, 2, 0], sizes = [2, 16, 12], strides = [1, 1, 1]} : vector<2x18x12xf32> to vector<2x16x12xf32>
    %272 = tpu.concatenate %269, %270, %271 in 2 : vector<2x16x12xf32>, vector<2x16x12xf32>, vector<2x16x12xf32> -> vector<2x16x36xf32>
    %273 = vector.shape_cast %272 : vector<2x16x36xf32> to vector<32x36xf32>
    %274 = arith.index_cast %c6_i32 : i32 to index
    %c0_112 = arith.constant 0 : index
    %c0_113 = arith.constant 0 : index
    %275 = vector.load %arg2[%274, %c0_112, %c0_113] : memref<8x32x48xf32, #tpu.memory_space<vmem>>, vector<1x32x48xf32>
    %276 = vector.shape_cast %275 : vector<1x32x48xf32> to vector<32x48xf32>
    %cst_114 = arith.constant dense<0.000000e+00> : vector<32x48xf32>
    %277 = tpu.matmul %273, %3, %cst_114 {dimension_numbers = #tpu.dot_dimension_numbers<[1], [0], [0], [1], [0, 0, 1, 1], [], []>} : vector<32x36xf32>, vector<36x48xf32>, vector<32x48xf32> -> vector<32x48xf32>
    %278 = arith.addf %276, %277 : vector<32x48xf32>
    %279 = vector.extract_strided_slice %278 {offsets = [0, 0], sizes = [32, 12], strides = [1, 1]} : vector<32x48xf32> to vector<32x12xf32>
    %280 = arith.negf %279 : vector<32x12xf32>
    %281 = math.exp %280 : vector<32x12xf32>
    %cst_115 = arith.constant 1.000000e+00 : f32
    %282 = vector.broadcast %cst_115 : f32 to vector<32x12xf32>
    %283 = arith.addf %282, %281 : vector<32x12xf32>
    %284 = arith.divf %282, %283 : vector<32x12xf32>
    %285 = vector.extract_strided_slice %278 {offsets = [0, 12], sizes = [32, 12], strides = [1, 1]} : vector<32x48xf32> to vector<32x12xf32>
    %286 = arith.negf %285 : vector<32x12xf32>
    %287 = math.exp %286 : vector<32x12xf32>
    %cst_116 = arith.constant 1.000000e+00 : f32
    %288 = vector.broadcast %cst_116 : f32 to vector<32x12xf32>
    %289 = arith.addf %288, %287 : vector<32x12xf32>
    %290 = arith.divf %288, %289 : vector<32x12xf32>
    %291 = vector.extract_strided_slice %278 {offsets = [0, 24], sizes = [32, 12], strides = [1, 1]} : vector<32x48xf32> to vector<32x12xf32>
    %292 = arith.negf %291 : vector<32x12xf32>
    %293 = math.exp %292 : vector<32x12xf32>
    %cst_117 = arith.constant 1.000000e+00 : f32
    %294 = vector.broadcast %cst_117 : f32 to vector<32x12xf32>
    %295 = arith.addf %294, %293 : vector<32x12xf32>
    %296 = arith.divf %294, %295 : vector<32x12xf32>
    %297 = vector.extract_strided_slice %278 {offsets = [0, 36], sizes = [32, 12], strides = [1, 1]} : vector<32x48xf32> to vector<32x12xf32>
    %298 = math.tanh %297 : vector<32x12xf32>
    %c0_118 = arith.constant 0 : index
    %c0_119 = arith.constant 0 : index
    %299 = vector.load %arg6[%c0_118, %c0_119] : memref<32x12xf32, #tpu.memory_space<vmem>>, vector<32x12xf32>
    %300 = arith.mulf %284, %299 : vector<32x12xf32>
    %301 = arith.mulf %290, %298 : vector<32x12xf32>
    %302 = arith.addf %300, %301 : vector<32x12xf32>
    %303 = math.tanh %302 : vector<32x12xf32>
    %304 = arith.mulf %296, %303 : vector<32x12xf32>
    %c0_120 = arith.constant 0 : index
    %c0_121 = arith.constant 0 : index
    %305 = vector.load %arg6[%c0_120, %c0_121] : memref<32x12xf32, #tpu.memory_space<vmem>>, vector<32x12xf32>
    tpu.vector_store %arg6[%c0_120, %c0_121], %302 {strides = array<i32>} : memref<32x12xf32, #tpu.memory_space<vmem>>, vector<32x12xf32>,
    %306 = vector.shape_cast %304 : vector<32x12xf32> to vector<2x16x12xf32>
    %c0_122 = arith.constant 0 : index
    %c1_123 = arith.constant 1 : index
    %c0_124 = arith.constant 0 : index
    %307 = vector.load %arg5[%c0_122, %c1_123, %c0_124] : memref<2x18x12xf32, #tpu.memory_space<vmem>>, vector<2x16x12xf32>
    tpu.vector_store %arg5[%c0_122, %c1_123, %c0_124], %306 {strides = array<i32>} : memref<2x18x12xf32, #tpu.memory_space<vmem>>, vector<2x16x12xf32>,
    %308 = arith.index_cast %c6_i32 : i32 to index
    %c0_125 = arith.constant 0 : index
    %c0_126 = arith.constant 0 : index
    %309 = vector.load %arg4[%308, %c0_125, %c0_126] : memref<8x32x12xf32, #tpu.memory_space<vmem>>, vector<1x32x12xf32>
    %310 = vector.shape_cast %309 : vector<1x32x12xf32> to vector<32x12xf32>
    %311 = vector.shape_cast %304 : vector<32x12xf32> to vector<1x32x12xf32>
    tpu.vector_store %arg4[%308, %c0_125, %c0_126], %311 {strides = array<i32>} : memref<8x32x12xf32, #tpu.memory_space<vmem>>, vector<1x32x12xf32>,
    %c7_i32 = arith.constant 7 : i32
    %c0_127 = arith.constant 0 : index
    %c0_128 = arith.constant 0 : index
    %c0_129 = arith.constant 0 : index
    %312 = vector.load %arg5[%c0_127, %c0_128, %c0_129] : memref<2x18x12xf32, #tpu.memory_space<vmem>>, vector<2x18x12xf32>
    %313 = vector.extract_strided_slice %312 {offsets = [0, 0, 0], sizes = [2, 16, 12], strides = [1, 1, 1]} : vector<2x18x12xf32> to vector<2x16x12xf32>
    %314 = vector.extract_strided_slice %312 {offsets = [0, 1, 0], sizes = [2, 16, 12], strides = [1, 1, 1]} : vector<2x18x12xf32> to vector<2x16x12xf32>
    %315 = vector.extract_strided_slice %312 {offsets = [0, 2, 0], sizes = [2, 16, 12], strides = [1, 1, 1]} : vector<2x18x12xf32> to vector<2x16x12xf32>
    %316 = tpu.concatenate %313, %314, %315 in 2 : vector<2x16x12xf32>, vector<2x16x12xf32>, vector<2x16x12xf32> -> vector<2x16x36xf32>
    %317 = vector.shape_cast %316 : vector<2x16x36xf32> to vector<32x36xf32>
    %318 = arith.index_cast %c7_i32 : i32 to index
    %c0_130 = arith.constant 0 : index
    %c0_131 = arith.constant 0 : index
    %319 = vector.load %arg2[%318, %c0_130, %c0_131] : memref<8x32x48xf32, #tpu.memory_space<vmem>>, vector<1x32x48xf32>
    %320 = vector.shape_cast %319 : vector<1x32x48xf32> to vector<32x48xf32>
    %cst_132 = arith.constant dense<0.000000e+00> : vector<32x48xf32>
    %321 = tpu.matmul %317, %3, %cst_132 {dimension_numbers = #tpu.dot_dimension_numbers<[1], [0], [0], [1], [0, 0, 1, 1], [], []>} : vector<32x36xf32>, vector<36x48xf32>, vector<32x48xf32> -> vector<32x48xf32>
    %322 = arith.addf %320, %321 : vector<32x48xf32>
    %323 = vector.extract_strided_slice %322 {offsets = [0, 0], sizes = [32, 12], strides = [1, 1]} : vector<32x48xf32> to vector<32x12xf32>
    %324 = arith.negf %323 : vector<32x12xf32>
    %325 = math.exp %324 : vector<32x12xf32>
    %cst_133 = arith.constant 1.000000e+00 : f32
    %326 = vector.broadcast %cst_133 : f32 to vector<32x12xf32>
    %327 = arith.addf %326, %325 : vector<32x12xf32>
    %328 = arith.divf %326, %327 : vector<32x12xf32>
    %329 = vector.extract_strided_slice %322 {offsets = [0, 12], sizes = [32, 12], strides = [1, 1]} : vector<32x48xf32> to vector<32x12xf32>
    %330 = arith.negf %329 : vector<32x12xf32>
    %331 = math.exp %330 : vector<32x12xf32>
    %cst_134 = arith.constant 1.000000e+00 : f32
    %332 = vector.broadcast %cst_134 : f32 to vector<32x12xf32>
    %333 = arith.addf %332, %331 : vector<32x12xf32>
    %334 = arith.divf %332, %333 : vector<32x12xf32>
    %335 = vector.extract_strided_slice %322 {offsets = [0, 24], sizes = [32, 12], strides = [1, 1]} : vector<32x48xf32> to vector<32x12xf32>
    %336 = arith.negf %335 : vector<32x12xf32>
    %337 = math.exp %336 : vector<32x12xf32>
    %cst_135 = arith.constant 1.000000e+00 : f32
    %338 = vector.broadcast %cst_135 : f32 to vector<32x12xf32>
    %339 = arith.addf %338, %337 : vector<32x12xf32>
    %340 = arith.divf %338, %339 : vector<32x12xf32>
    %341 = vector.extract_strided_slice %322 {offsets = [0, 36], sizes = [32, 12], strides = [1, 1]} : vector<32x48xf32> to vector<32x12xf32>
    %342 = math.tanh %341 : vector<32x12xf32>
    %c0_136 = arith.constant 0 : index
    %c0_137 = arith.constant 0 : index
    %343 = vector.load %arg6[%c0_136, %c0_137] : memref<32x12xf32, #tpu.memory_space<vmem>>, vector<32x12xf32>
    %344 = arith.mulf %328, %343 : vector<32x12xf32>
    %345 = arith.mulf %334, %342 : vector<32x12xf32>
    %346 = arith.addf %344, %345 : vector<32x12xf32>
    %347 = math.tanh %346 : vector<32x12xf32>
    %348 = arith.mulf %340, %347 : vector<32x12xf32>
    %c0_138 = arith.constant 0 : index
    %c0_139 = arith.constant 0 : index
    %349 = vector.load %arg6[%c0_138, %c0_139] : memref<32x12xf32, #tpu.memory_space<vmem>>, vector<32x12xf32>
    tpu.vector_store %arg6[%c0_138, %c0_139], %346 {strides = array<i32>} : memref<32x12xf32, #tpu.memory_space<vmem>>, vector<32x12xf32>,
    %350 = vector.shape_cast %348 : vector<32x12xf32> to vector<2x16x12xf32>
    %c0_140 = arith.constant 0 : index
    %c1_141 = arith.constant 1 : index
    %c0_142 = arith.constant 0 : index
    %351 = vector.load %arg5[%c0_140, %c1_141, %c0_142] : memref<2x18x12xf32, #tpu.memory_space<vmem>>, vector<2x16x12xf32>
    tpu.vector_store %arg5[%c0_140, %c1_141, %c0_142], %350 {strides = array<i32>} : memref<2x18x12xf32, #tpu.memory_space<vmem>>, vector<2x16x12xf32>,
    %352 = arith.index_cast %c7_i32 : i32 to index
    %c0_143 = arith.constant 0 : index
    %c0_144 = arith.constant 0 : index
    %353 = vector.load %arg4[%352, %c0_143, %c0_144] : memref<8x32x12xf32, #tpu.memory_space<vmem>>, vector<1x32x12xf32>
    %354 = vector.shape_cast %353 : vector<1x32x12xf32> to vector<32x12xf32>
    %355 = vector.shape_cast %348 : vector<32x12xf32> to vector<1x32x12xf32>
    tpu.vector_store %arg4[%352, %c0_143, %c0_144], %355 {strides = array<i32>} : memref<8x32x12xf32, #tpu.memory_space<vmem>>, vector<1x32x12xf32>,
    %c8_i32 = arith.constant 8 : i32
    return
  }
  func.func @transform_0(%arg0: i32, %arg1: i32) -> (i32, i32, i32) {
    %c0_i32 = arith.constant 0 : i32
    %c0_i32_0 = arith.constant 0 : i32
    return %arg1, %arg0, %c0_i32 : i32, i32, i32
  }
  func.func @transform_1(%arg0: i32, %arg1: i32) -> (i32, i32) {
    %c0_i32 = arith.constant 0 : i32
    %c0_i32_0 = arith.constant 0 : i32
    %c0_i32_1 = arith.constant 0 : i32
    return %c0_i32, %c0_i32_0 : i32, i32
  }
  func.func @transform_2(%arg0: i32, %arg1: i32) -> (i32, i32, i32) {
    %c0_i32 = arith.constant 0 : i32
    %c0_i32_0 = arith.constant 0 : i32
    return %arg1, %arg0, %c0_i32 : i32, i32, i32
  }
}

</mosaic_0001>

<llo_original>
// kernel: pixel_rnn_layer.1
$region0: #{pixel_rnn_layer.1}
  #allocation0 [shape = 'u32[]', space=smem, size = 0x4, offset = 0x4, fixed_abs, tag = 'smem constant byte address 0x4 - core index']
  #allocation1 [shape = 'u32[144,128]{1,0:T(1,128)}', space=vmem, size = 0x12000, scoped, tag = 'internal scratch']
  #allocation2 [shape = 'f32[2,18,12]{2,1,0:T(8,128)}', space=vmem, size = 0x6000, scoped, tag = 'scratch operand']
  #allocation3 [shape = 'f32[32,12]{1,0:T(8,128)}', space=vmem, size = 0x4000, scoped, tag = 'scratch operand']
  %s0 = inlined_call_operand.vmem [shape: f32[8,32,48], index: 0, kind: input, shape index: {}]
  %s1 = inlined_call_operand.vmem [shape: f32[36,48], index: 1, kind: input, shape index: {}]
  %s2 = inlined_call_operand.vmem [shape: f32[8,32,12], index: 2, kind: output, shape index: {}]
  %s3 = sld [smem:[#allocation0]]
  $region22: #{pixel_rnn_layer.1} parent=0
    _
  %s5 = ssub.s32 1, %s3
  %s6 = scalar_select 0, %s5, %s3
  // Predicated region
  $region2: #{pixel_rnn_layer.1} parent=0 // pred_check
    _
  $region3: #{pixel_rnn_layer.1} parent=0 // pred_check_branch
    %8 = sbr.rel (0) target = $region5
  $region4: #{pixel_rnn_layer.1} parent=0 // pred_region
    _
  $region5: #{pixel_rnn_layer.1} parent=0 // pred_fallthru
    _
  // Predicated region
  $region6: #{pixel_rnn_layer.1} parent=0 // pred_check
    _
  $region7: #{pixel_rnn_layer.1} parent=0 // pred_check_branch
    %10 = sbr.rel (0) target = $region9
  $region8: #{pixel_rnn_layer.1} parent=0 // pred_region
    _
  $region9: #{pixel_rnn_layer.1} parent=0 // pred_fallthru
    _
  %p11 = scmp.eq.s32.totalorder 0, 0
  // Predicated region
  $region10: #{pixel_rnn_layer.1} parent=0 // pred_check
    %p12 = pneg %p11
  $region11: #{pixel_rnn_layer.1} parent=0 // pred_check_branch
    %14 = sbr.rel (%p12) target = $region13
  $region12: #{pixel_rnn_layer.1} parent=0 // pred_region
    %vm15 = vcmask 97280
    %16 = vst.msk [vmem:[#allocation2] sm:$0xff] %vm15, 0.0
    %17 = vst.msk [vmem:[#allocation2 + $0x8] sm:$0xff] %vm15, 0.0
    %vm18 = vcmask 91136
    %19 = vst.msk [vmem:[#allocation2 + $0x10] sm:$0x3] %vm18, 0.0
    %20 = vst.msk [vmem:[#allocation2 + $0x18] sm:$0xff] %vm15, 0.0
    %21 = vst.msk [vmem:[#allocation2 + $0x20] sm:$0xff] %vm15, 0.0
    %22 = vst.msk [vmem:[#allocation2 + $0x28] sm:$0x3] %vm18, 0.0
    %23 = vst.msk [vmem:[#allocation3] sm:$0xff] %vm15, 0.0
    %24 = vst.msk [vmem:[#allocation3 + $0x8] sm:$0xff] %vm15, 0.0
    %25 = vst.msk [vmem:[#allocation3 + $0x10] sm:$0xff] %vm15, 0.0
    %26 = vst.msk [vmem:[#allocation3 + $0x18] sm:$0xff] %vm15, 0.0
  $region13: #{pixel_rnn_layer.1} parent=0 // pred_fallthru
    _
  %v27 = vld [vmem:[%s1] sm:$0xff]
  %v28 = vld [vmem:[%s1 + $0x8] sm:$0xff]
  %v29 = vld [vmem:[%s1 + $0x10] sm:$0xff]
  %v30 = vld [vmem:[%s1 + $0x18] sm:$0xff]
  %v31 = vld [vmem:[%s1 + $0x20] sm:$0xf]
  %v32 = vld [vmem:[#allocation2] sm:$0xff]
  %v33 = vld [vmem:[#allocation2 + $0x8] sm:$0xff]
  %v34 = vld [vmem:[#allocation2 + $0x10] sm:$0x3]
  %v35 = vld [vmem:[#allocation2 + $0x18] sm:$0xff]
  %v36 = vld [vmem:[#allocation2 + $0x20] sm:$0xff]
  %v37 = vld [vmem:[#allocation2 + $0x28] sm:$0x3]
  %vm44 = vcmask 1046528
  %v45 = vrot.slane %v32, 1
  %v46 = vrot.slane %v33, 1
  %v47 = vsel %vm44, %v45, %v46
  %v48 = vrot.slane %v34, 1
  %v49 = vsel %vm44, %v46, %v48
  %v50 = vrot.slane %v35, 1
  %v51 = vrot.slane %v36, 1
  %v52 = vsel %vm44, %v50, %v51
  %v53 = vrot.slane %v37, 1
  %v54 = vsel %vm44, %v51, %v53
  %55 = vrot.lane.b32.xlu0 %v47, 12
  %v56 = vpop.permute.xlu0 %55
  %57 = vrot.lane.b32.xlu0 %v49, 12
  %v58 = vpop.permute.xlu0 %57
  %59 = vrot.lane.b32.xlu0 %v52, 12
  %v60 = vpop.permute.xlu0 %59
  %61 = vrot.lane.b32.xlu0 %v54, 12
  %v62 = vpop.permute.xlu0 %61
  %vm67 = vcmask 1045504
  %v68 = vrot.slane %v32, 2
  %v69 = vrot.slane %v33, 2
  %v70 = vsel %vm67, %v68, %v69
  %v71 = vrot.slane %v34, 2
  %v72 = vsel %vm67, %v69, %v71
  %v73 = vrot.slane %v35, 2
  %v74 = vrot.slane %v36, 2
  %v75 = vsel %vm67, %v73, %v74
  %v76 = vrot.slane %v37, 2
  %v77 = vsel %vm67, %v74, %v76
  %78 = vrot.lane.b32.xlu0 %v70, 24
  %v79 = vpop.permute.xlu0 %78
  %80 = vrot.lane.b32.xlu0 %v72, 24
  %v81 = vpop.permute.xlu0 %80
  %82 = vrot.lane.b32.xlu0 %v75, 24
  %v83 = vpop.permute.xlu0 %82
  %84 = vrot.lane.b32.xlu0 %v77, 24
  %v85 = vpop.permute.xlu0 %84
  %vm90 = vcmask 97280
  %v91 = vsel %vm90, %v32, %v56
  %v92 = vsel %vm90, %v33, %v58
  %v93 = vsel %vm90, %v35, %v60
  %v94 = vsel %vm90, %v36, %v62
  %vm95 = vcmask 195584
  %v96 = vsel %vm95, %v91, %v79
  %v97 = vsel %vm95, %v92, %v81
  %v98 = vsel %vm95, %v93, %v83
  %v99 = vsel %vm95, %v94, %v85
  %v100 = vld [vmem:[%s0] sm:$0xff]
  %v101 = vld [vmem:[%s0 + $0x8] sm:$0xff]
  %v102 = vld [vmem:[%s0 + $0x10] sm:$0xff]
  %v103 = vld [vmem:[%s0 + $0x18] sm:$0xff]
  %vm104 = vcmask 293888
  %v106 = vsel %vm104, %v96, 0
  %v109 = vsel %vm104, %v97, 0
  %v112 = vsel %vm104, %v98, 0
  %v115 = vsel %vm104, %v99, 0
  %vm117 = vcmask 1043456
  %v119 = vsel %vm117, %v31, 0
  %121 = vmatprep.subr.mxu0 0.0
  %122 = vmatpush1.msra.mxu0 0.0
  %123 = vmatprep.subr.mxu0 0.0
  %124 = vmatpush1.msra.mxu0 0.0
  %125 = vmatprep.subr.mxu0 0.0
  %126 = vmatpush1.msra.mxu0 0.0
  %127 = vmatprep.subr.mxu0 0.0
  %128 = vmatpush1.msra.mxu0 0.0
  %129 = vmatprep.subr.mxu0 0.0
  %130 = vmatpush1.msra.mxu0 0.0
  %131 = vmatprep.subr.mxu0 0.0
  %132 = vmatpush1.msra.mxu0 0.0
  %133 = vmatprep.subr.mxu0 0.0
  %134 = vmatpush1.msra.mxu0 0.0
  %135 = vmatprep.subr.mxu0 0.0
  %136 = vmatpush1.msra.mxu0 0.0
  %137 = vmatprep.subr.mxu0 0.0
  %138 = vmatpush1.msra.mxu0 0.0
  %139 = vmatprep.subr.mxu0 0.0
  %140 = vmatpush1.msra.mxu0 0.0
  %141 = vmatprep.subr.mxu0 0.0
  %142 = vmatpush1.msra.mxu0 0.0
  %143 = vmatprep.subr.mxu0 0.0
  %144 = vmatpush1.msra.mxu0 %v119
  %145 = vmatprep.subr.mxu0 0.0
  %146 = vmatpush1.msra.mxu0 %v30
  %147 = vmatprep.subr.mxu0 0.0
  %148 = vmatpush1.msra.mxu0 %v29
  %149 = vmatprep.subr.mxu0 0.0
  %150 = vmatpush1.msra.mxu0 %v28
  %151 = vmatprep.subr.mxu0 0.0
  %152 = vmatpush1.msra.mxu0 %v27
  %153 = vmatprep.subr.mxu0 0.0
  %154 = vmatpush2.msra.mxu0 0.0
  %155 = vmatprep.subr.mxu0 0.0
  %156 = vmatpush2.msra.mxu0 0.0
  %157 = vmatprep.subr.mxu0 0.0
  %158 = vmatpush2.msra.mxu0 0.0
  %159 = vmatprep.subr.mxu0 0.0
  %160 = vmatpush2.msra.mxu0 0.0
  %161 = vmatprep.subr.mxu0 0.0
  %162 = vmatpush2.msra.mxu0 0.0
  %163 = vmatprep.subr.mxu0 0.0
  %164 = vmatpush2.msra.mxu0 0.0
  %165 = vmatprep.subr.mxu0 0.0
  %166 = vmatpush2.msra.mxu0 0.0
  %167 = vmatprep.subr.mxu0 0.0
  %168 = vmatpush2.msra.mxu0 0.0
  %169 = vmatprep.subr.mxu0 0.0
  %170 = vmatpush2.msra.mxu0 0.0
  %171 = vmatprep.subr.mxu0 0.0
  %172 = vmatpush2.msra.mxu0 0.0
  %173 = vmatprep.subr.mxu0 0.0
  %174 = vmatpush2.msra.mxu0 0.0
  %175 = vmatprep.subr.mxu0 0.0
  %176 = vmatpush2.msra.mxu0 0.0
  %177 = vmatprep.subr.mxu0 0.0
  %178 = vmatpush2.msra.mxu0 0.0
  %179 = vmatprep.subr.mxu0 0.0
  %180 = vmatpush2.msra.mxu0 0.0
  %181 = vmatprep.subr.mxu0 0.0
  %182 = vmatpush2.msra.mxu0 0.0
  %183 = vmatprep.subr.mxu0 0.0
  %184 = vmatpush2.msra.mxu0 0.0
  %185 = vmatprep.mubr.f32.mxu0 0.0
  %186 = vmatmul.mubr.f32.gmra.mxu0 %v106
  %v187 = vpop.f32.mrf.mxu0
  %v188 = vadd.f32 0.0, %v187
  %v189 = vpop.f32.mrf.mxu0
  %190 = vmatprep.mubr.f32.mxu0 0.0
  %191 = vmatmul.mubr.f32.gmra.mxu0 %v109
  %v192 = vpop.f32.mrf.mxu0
  %v193 = vadd.f32 0.0, %v192
  %v194 = vpop.f32.mrf.mxu0
  %195 = vmatprep.mubr.f32.mxu0 0.0
  %196 = vmatmul.mubr.f32.gmra.mxu0 %v112
  %v197 = vpop.f32.mrf.mxu0
  %v198 = vadd.f32 0.0, %v197
  %v199 = vpop.f32.mrf.mxu0
  %200 = vmatprep.mubr.f32.mxu0 0.0
  %201 = vmatmul.mubr.f32.gmra.mxu0 %v115
  %v202 = vpop.f32.mrf.mxu0
  %v203 = vadd.f32 0.0, %v202
  %v204 = vpop.f32.mrf.mxu0
  %205 = vdwg.mxu0
  %v206 = vadd.f32 %v100, %v188
  %v207 = vadd.f32 %v101, %v193
  %v208 = vadd.f32 %v102, %v198
  %v209 = vadd.f32 %v103, %v203
  %v210 = vxor.u32 %v206, 2147483648
  %v211 = vxor.u32 %v207, 2147483648
  %v212 = vxor.u32 %v208, 2147483648
  %v213 = vxor.u32 %v209, 2147483648
  %v214 = vmul.f32 %v210, 1.442695
  %v215 = vpow.pop %v214
  %v216 = vmul.f32 %v211, 1.442695
  %v217 = vpow.pop %v216
  %v218 = vmul.f32 %v212, 1.442695
  %v219 = vpow.pop %v218
  %v220 = vmul.f32 %v213, 1.442695
  %v221 = vpow.pop %v220
  %v222 = vadd.f32 %v215, 1.0
  %v223 = vadd.f32 %v217, 1.0
  %v224 = vadd.f32 %v219, 1.0
  %v225 = vadd.f32 %v221, 1.0
  %v226 = vrcp.pop %v222
  %v227 = vmul.f32 1.0, %v226
  %v228 = vrcp.pop %v223
  %v229 = vmul.f32 1.0, %v228
  %v230 = vrcp.pop %v224
  %v231 = vmul.f32 1.0, %v230
  %v232 = vrcp.pop %v225
  %v233 = vmul.f32 1.0, %v232
  %v234 = vtanh.pop %v206
  %v235 = vtanh.pop %v207
  %v236 = vtanh.pop %v208
  %v237 = vtanh.pop %v209
  %v238 = vld [vmem:[#allocation3] sm:$0xff]
  %v239 = vld [vmem:[#allocation3 + $0x8] sm:$0xff]
  %v240 = vld [vmem:[#allocation3 + $0x10] sm:$0xff]
  %v241 = vld [vmem:[#allocation3 + $0x18] sm:$0xff]
  %v242 = vmul.f32 %v227, %v238
  %v243 = vmul.f32 %v229, %v239
  %v244 = vmul.f32 %v231, %v240
  %v245 = vmul.f32 %v233, %v241
  %250 = vrot.lane.b32.xlu0 %v234, 104
  %v251 = vpop.permute.xlu0 %250
  %252 = vrot.lane.b32.xlu0 %v235, 104
  %v253 = vpop.permute.xlu0 %252
  %254 = vrot.lane.b32.xlu0 %v236, 104
  %v255 = vpop.permute.xlu0 %254
  %256 = vrot.lane.b32.xlu0 %v237, 104
  %v257 = vpop.permute.xlu0 %256
  %v262 = vmul.f32 %v227, %v251
  %v263 = vmul.f32 %v229, %v253
  %v264 = vmul.f32 %v231, %v255
  %v265 = vmul.f32 %v233, %v257
  %270 = vrot.lane.b32.xlu0 %v262, 116
  %v271 = vpop.permute.xlu0 %270
  %272 = vrot.lane.b32.xlu0 %v263, 116
  %v273 = vpop.permute.xlu0 %272
  %274 = vrot.lane.b32.xlu0 %v264, 116
  %v275 = vpop.permute.xlu0 %274
  %276 = vrot.lane.b32.xlu0 %v265, 116
  %v277 = vpop.permute.xlu0 %276
  %v282 = vadd.f32 %v242, %v271
  %v283 = vadd.f32 %v243, %v273
  %v284 = vadd.f32 %v244, %v275
  %v285 = vadd.f32 %v245, %v277
  %v286 = vtanh.pop %v282
  %v287 = vtanh.pop %v283
  %v288 = vtanh.pop %v284
  %v289 = vtanh.pop %v285
  %294 = vrot.lane.b32.xlu0 %v286, 24
  %v295 = vpop.permute.xlu0 %294
  %296 = vrot.lane.b32.xlu0 %v287, 24
  %v297 = vpop.permute.xlu0 %296
  %298 = vrot.lane.b32.xlu0 %v288, 24
  %v299 = vpop.permute.xlu0 %298
  %300 = vrot.lane.b32.xlu0 %v289, 24
  %v301 = vpop.permute.xlu0 %300
  %v306 = vmul.f32 %v227, %v295
  %v307 = vmul.f32 %v229, %v297
  %v308 = vmul.f32 %v231, %v299
  %v309 = vmul.f32 %v233, %v301
  %310 = vst.msk [vmem:[#allocation3] sm:$0xff] %vm90, %v282
  %311 = vst.msk [vmem:[#allocation3 + $0x8] sm:$0xff] %vm90, %v283
  %312 = vst.msk [vmem:[#allocation3 + $0x10] sm:$0xff] %vm90, %v284
  %313 = vst.msk [vmem:[#allocation3 + $0x18] sm:$0xff] %vm90, %v285
  %318 = vrot.lane.b32.xlu0 %v306, 104
  %v319 = vpop.permute.xlu0 %318
  %320 = vrot.lane.b32.xlu0 %v307, 104
  %v321 = vpop.permute.xlu0 %320
  %322 = vrot.lane.b32.xlu0 %v308, 104
  %v323 = vpop.permute.xlu0 %322
  %324 = vrot.lane.b32.xlu0 %v309, 104
  %v325 = vpop.permute.xlu0 %324
  %330 = vst.msk [vmem:[#allocation2 + $0x1] sm:$0xff] %vm90, %v319
  %331 = vst.msk [vmem:[#allocation2 + $0x9] sm:$0xff] %vm90, %v321
  %332 = vst.msk [vmem:[#allocation2 + $0x19] sm:$0xff] %vm90, %v323
  %333 = vst.msk [vmem:[#allocation2 + $0x21] sm:$0xff] %vm90, %v325
  %334 = vst.msk [vmem:[%s2] sm:$0xff] %vm90, %v319
  %335 = vst.msk [vmem:[%s2 + $0x8] sm:$0xff] %vm90, %v321
  %336 = vst.msk [vmem:[%s2 + $0x10] sm:$0xff] %vm90, %v323
  %337 = vst.msk [vmem:[%s2 + $0x18] sm:$0xff] %vm90, %v325
  %v338 = vld [vmem:[#allocation2] sm:$0xff]
  %v339 = vld [vmem:[#allocation2 + $0x8] sm:$0xff]
  %v340 = vld [vmem:[#allocation2 + $0x10] sm:$0x3]
  %v341 = vld [vmem:[#allocation2 + $0x18] sm:$0xff]
  %v342 = vld [vmem:[#allocation2 + $0x20] sm:$0xff]
  %v343 = vld [vmem:[#allocation2 + $0x28] sm:$0x3]
  %v350 = vrot.slane %v338, 1
  %v351 = vrot.slane %v339, 1
  %v352 = vsel %vm44, %v350, %v351
  %v353 = vrot.slane %v340, 1
  %v354 = vsel %vm44, %v351, %v353
  %v355 = vrot.slane %v341, 1
  %v356 = vrot.slane %v342, 1
  %v357 = vsel %vm44, %v355, %v356
  %v358 = vrot.slane %v343, 1
  %v359 = vsel %vm44, %v356, %v358
  %360 = vrot.lane.b32.xlu0 %v352, 12
  %v361 = vpop.permute.xlu0 %360
  %362 = vrot.lane.b32.xlu0 %v354, 12
  %v363 = vpop.permute.xlu0 %362
  %364 = vrot.lane.b32.xlu0 %v357, 12
  %v365 = vpop.permute.xlu0 %364
  %366 = vrot.lane.b32.xlu0 %v359, 12
  %v367 = vpop.permute.xlu0 %366
  %v372 = vrot.slane %v338, 2
  %v373 = vrot.slane %v339, 2
  %v374 = vsel %vm67, %v372, %v373
  %v375 = vrot.slane %v340, 2
  %v376 = vsel %vm67, %v373, %v375
  %v377 = vrot.slane %v341, 2
  %v378 = vrot.slane %v342, 2
  %v379 = vsel %vm67, %v377, %v378
  %v380 = vrot.slane %v343, 2
  %v381 = vsel %vm67, %v378, %v380
  %382 = vrot.lane.b32.xlu0 %v374, 24
  %v383 = vpop.permute.xlu0 %382
  %384 = vrot.lane.b32.xlu0 %v376, 24
  %v385 = vpop.permute.xlu0 %384
  %386 = vrot.lane.b32.xlu0 %v379, 24
  %v387 = vpop.permute.xlu0 %386
  %388 = vrot.lane.b32.xlu0 %v381, 24
  %v389 = vpop.permute.xlu0 %388
  %v394 = vsel %vm90, %v338, %v361
  %v395 = vsel %vm90, %v339, %v363
  %v396 = vsel %vm90, %v341, %v365
  %v397 = vsel %vm90, %v342, %v367
  %v398 = vsel %vm95, %v394, %v383
  %v399 = vsel %vm95, %v395, %v385
  %v400 = vsel %vm95, %v396, %v387
  %v401 = vsel %vm95, %v397, %v389
  %s402 = scalar_lea.vmem %s0, 32
  %v403 = vld [vmem:[%s402] sm:$0xff]
  %v404 = vld [vmem:[%s402 + $0x8] sm:$0xff]
  %v405 = vld [vmem:[%s402 + $0x10] sm:$0xff]
  %v406 = vld [vmem:[%s402 + $0x18] sm:$0xff]
  %v408 = vsel %vm104, %v398, 0
  %v411 = vsel %vm104, %v399, 0
  %v414 = vsel %vm104, %v400, 0
  %v417 = vsel %vm104, %v401, 0
  %419 = vmatprep.subr.mxu0 0.0
  %420 = vmatpush1.msra.mxu0 0.0
  %421 = vmatprep.subr.mxu0 0.0
  %422 = vmatpush1.msra.mxu0 0.0
  %423 = vmatprep.subr.mxu0 0.0
  %424 = vmatpush1.msra.mxu0 0.0
  %425 = vmatprep.subr.mxu0 0.0
  %426 = vmatpush1.msra.mxu0 0.0
  %427 = vmatprep.subr.mxu0 0.0
  %428 = vmatpush1.msra.mxu0 0.0
  %429 = vmatprep.subr.mxu0 0.0
  %430 = vmatpush1.msra.mxu0 0.0
  %431 = vmatprep.subr.mxu0 0.0
  %432 = vmatpush1.msra.mxu0 0.0
  %433 = vmatprep.subr.mxu0 0.0
  %434 = vmatpush1.msra.mxu0 0.0
  %435 = vmatprep.subr.mxu0 0.0
  %436 = vmatpush1.msra.mxu0 0.0
  %437 = vmatprep.subr.mxu0 0.0
  %438 = vmatpush1.msra.mxu0 0.0
  %439 = vmatprep.subr.mxu0 0.0
  %440 = vmatpush1.msra.mxu0 0.0
  %441 = vmatprep.subr.mxu0 0.0
  %442 = vmatpush1.msra.mxu0 %v119
  %443 = vmatprep.subr.mxu0 0.0
  %444 = vmatpush1.msra.mxu0 %v30
  %445 = vmatprep.subr.mxu0 0.0
  %446 = vmatpush1.msra.mxu0 %v29
  %447 = vmatprep.subr.mxu0 0.0
  %448 = vmatpush1.msra.mxu0 %v28
  %449 = vmatprep.subr.mxu0 0.0
  %450 = vmatpush1.msra.mxu0 %v27
  %451 = vmatprep.subr.mxu0 0.0
  %452 = vmatpush2.msra.mxu0 0.0
  %453 = vmatprep.subr.mxu0 0.0
  %454 = vmatpush2.msra.mxu0 0.0
  %455 = vmatprep.subr.mxu0 0.0
  %456 = vmatpush2.msra.mxu0 0.0
  %457 = vmatprep.subr.mxu0 0.0
  %458 = vmatpush2.msra.mxu0 0.0
  %459 = vmatprep.subr.mxu0 0.0
  %460 = vmatpush2.msra.mxu0 0.0
  %461 = vmatprep.subr.mxu0 0.0
  %462 = vmatpush2.msra.mxu0 0.0
  %463 = vmatprep.subr.mxu0 0.0
  %464 = vmatpush2.msra.mxu0 0.0
  %465 = vmatprep.subr.mxu0 0.0
  %466 = vmatpush2.msra.mxu0 0.0
  %467 = vmatprep.subr.mxu0 0.0
  %468 = vmatpush2.msra.mxu0 0.0
  %469 = vmatprep.subr.mxu0 0.0
  %470 = vmatpush2.msra.mxu0 0.0
  %471 = vmatprep.subr.mxu0 0.0
  %472 = vmatpush2.msra.mxu0 0.0
  %473 = vmatprep.subr.mxu0 0.0
  %474 = vmatpush2.msra.mxu0 0.0
  %475 = vmatprep.subr.mxu0 0.0
  %476 = vmatpush2.msra.mxu0 0.0
  %477 = vmatprep.subr.mxu0 0.0
  %478 = vmatpush2.msra.mxu0 0.0
  %479 = vmatprep.subr.mxu0 0.0
  %480 = vmatpush2.msra.mxu0 0.0
  %481 = vmatprep.subr.mxu0 0.0
  %482 = vmatpush2.msra.mxu0 0.0
  %483 = vmatprep.mubr.f32.mxu0 0.0
  %484 = vmatmul.mubr.f32.gmra.mxu0 %v408
  %v485 = vpop.f32.mrf.mxu0
  %v486 = vadd.f32 0.0, %v485
  %v487 = vpop.f32.mrf.mxu0
  %488 = vmatprep.mubr.f32.mxu0 0.0
  %489 = vmatmul.mubr.f32.gmra.mxu0 %v411
  %v490 = vpop.f32.mrf.mxu0
  %v491 = vadd.f32 0.0, %v490
  %v492 = vpop.f32.mrf.mxu0
  %493 = vmatprep.mubr.f32.mxu0 0.0
  %494 = vmatmul.mubr.f32.gmra.mxu0 %v414
  %v495 = vpop.f32.mrf.mxu0
  %v496 = vadd.f32 0.0, %v495
  %v497 = vpop.f32.mrf.mxu0
  %498 = vmatprep.mubr.f32.mxu0 0.0
  %499 = vmatmul.mubr.f32.gmra.mxu0 %v417
  %v500 = vpop.f32.mrf.mxu0
  %v501 = vadd.f32 0.0, %v500
  %v502 = vpop.f32.mrf.mxu0
  %503 = vdwg.mxu0
  %v504 = vadd.f32 %v403, %v486
  %v505 = vadd.f32 %v404, %v491
  %v506 = vadd.f32 %v405, %v496
  %v507 = vadd.f32 %v406, %v501
  %v508 = vxor.u32 %v504, 2147483648
  %v509 = vxor.u32 %v505, 2147483648
  %v510 = vxor.u32 %v506, 2147483648
  %v511 = vxor.u32 %v507, 2147483648
  %v512 = vmul.f32 %v508, 1.442695
  %v513 = vpow.pop %v512
  %v514 = vmul.f32 %v509, 1.442695
  %v515 = vpow.pop %v514
  %v516 = vmul.f32 %v510, 1.442695
  %v517 = vpow.pop %v516
  %v518 = vmul.f32 %v511, 1.442695
  %v519 = vpow.pop %v518
  %v520 = vadd.f32 %v513, 1.0
  %v521 = vadd.f32 %v515, 1.0
  %v522 = vadd.f32 %v517, 1.0
  %v523 = vadd.f32 %v519, 1.0
  %v524 = vrcp.pop %v520
  %v525 = vmul.f32 1.0, %v524
  %v526 = vrcp.pop %v521
  %v527 = vmul.f32 1.0, %v526
  %v528 = vrcp.pop %v522
  %v529 = vmul.f32 1.0, %v528
  %v530 = vrcp.pop %v523
  %v531 = vmul.f32 1.0, %v530
  %v532 = vtanh.pop %v504
  %v533 = vtanh.pop %v505
  %v534 = vtanh.pop %v506
  %v535 = vtanh.pop %v507
  %v536 = vld [vmem:[#allocation3] sm:$0xff]
  %v537 = vld [vmem:[#allocation3 + $0x8] sm:$0xff]
  %v538 = vld [vmem:[#allocation3 + $0x10] sm:$0xff]
  %v539 = vld [vmem:[#allocation3 + $0x18] sm:$0xff]
  %v540 = vmul.f32 %v525, %v536
  %v541 = vmul.f32 %v527, %v537
  %v542 = vmul.f32 %v529, %v538
  %v543 = vmul.f32 %v531, %v539
  %548 = vrot.lane.b32.xlu0 %v532, 104
  %v549 = vpop.permute.xlu0 %548
  %550 = vrot.lane.b32.xlu0 %v533, 104
  %v551 = vpop.permute.xlu0 %550
  %552 = vrot.lane.b32.xlu0 %v534, 104
  %v553 = vpop.permute.xlu0 %552
  %554 = vrot.lane.b32.xlu0 %v535, 104
  %v555 = vpop.permute.xlu0 %554
  %v560 = vmul.f32 %v525, %v549
  %v561 = vmul.f32 %v527, %v551
  %v562 = vmul.f32 %v529, %v553
  %v563 = vmul.f32 %v531, %v555
  %568 = vrot.lane.b32.xlu0 %v560, 116
  %v569 = vpop.permute.xlu0 %568
  %570 = vrot.lane.b32.xlu0 %v561, 116
  %v571 = vpop.permute.xlu0 %570
  %572 = vrot.lane.b32.xlu0 %v562, 116
  %v573 = vpop.permute.xlu0 %572
  %574 = vrot.lane.b32.xlu0 %v563, 116
  %v575 = vpop.permute.xlu0 %574
  %v580 = vadd.f32 %v540, %v569
  %v581 = vadd.f32 %v541, %v571
  %v582 = vadd.f32 %v542, %v573
  %v583 = vadd.f32 %v543, %v575
  %v584 = vtanh.pop %v580
  %v585 = vtanh.pop %v581
  %v586 = vtanh.pop %v582
  %v587 = vtanh.pop %v583
  %592 = vrot.lane.b32.xlu0 %v584, 24
  %v593 = vpop.permute.xlu0 %592
  %594 = vrot.lane.b32.xlu0 %v585, 24
  %v595 = vpop.permute.xlu0 %594
  %596 = vrot.lane.b32.xlu0 %v586, 24
  %v597 = vpop.permute.xlu0 %596
  %598 = vrot.lane.b32.xlu0 %v587, 24
  %v599 = vpop.permute.xlu0 %598
  %v604 = vmul.f32 %v525, %v593
  %v605 = vmul.f32 %v527, %v595
  %v606 = vmul.f32 %v529, %v597
  %v607 = vmul.f32 %v531, %v599
  %608 = vst.msk [vmem:[#allocation3] sm:$0xff] %vm90, %v580
  %609 = vst.msk [vmem:[#allocation3 + $0x8] sm:$0xff] %vm90, %v581
  %610 = vst.msk [vmem:[#allocation3 + $0x10] sm:$0xff] %vm90, %v582
  %611 = vst.msk [vmem:[#allocation3 + $0x18] sm:$0xff] %vm90, %v583
  %616 = vrot.lane.b32.xlu0 %v604, 104
  %v617 = vpop.permute.xlu0 %616
  %618 = vrot.lane.b32.xlu0 %v605, 104
  %v619 = vpop.permute.xlu0 %618
  %620 = vrot.lane.b32.xlu0 %v606, 104
  %v621 = vpop.permute.xlu0 %620
  %622 = vrot.lane.b32.xlu0 %v607, 104
  %v623 = vpop.permute.xlu0 %622
  %628 = vst.msk [vmem:[#allocation2 + $0x1] sm:$0xff] %vm90, %v617
  %629 = vst.msk [vmem:[#allocation2 + $0x9] sm:$0xff] %vm90, %v619
  %630 = vst.msk [vmem:[#allocation2 + $0x19] sm:$0xff] %vm90, %v621
  %631 = vst.msk [vmem:[#allocation2 + $0x21] sm:$0xff] %vm90, %v623
  %s632 = scalar_lea.vmem %s2, 32
  %633 = vst.msk [vmem:[%s632] sm:$0xff] %vm90, %v617
  %634 = vst.msk [vmem:[%s632 + $0x8] sm:$0xff] %vm90, %v619
  %635 = vst.msk [vmem:[%s632 + $0x10] sm:$0xff] %vm90, %v621
  %636 = vst.msk [vmem:[%s632 + $0x18] sm:$0xff] %vm90, %v623
  %v637 = vld [vmem:[#allocation2] sm:$0xff]
  %v638 = vld [vmem:[#allocation2 + $0x8] sm:$0xff]
  %v639 = vld [vmem:[#allocation2 + $0x10] sm:$0x3]
  %v640 = vld [vmem:[#allocation2 + $0x18] sm:$0xff]
  %v641 = vld [vmem:[#allocation2 + $0x20] sm:$0xff]
  %v642 = vld [vmem:[#allocation2 + $0x28] sm:$0x3]
  %v649 = vrot.slane %v637, 1
  %v650 = vrot.slane %v638, 1
  %v651 = vsel %vm44, %v649, %v650
  %v652 = vrot.slane %v639, 1
  %v653 = vsel %vm44, %v650, %v652
  %v654 = vrot.slane %v640, 1
  %v655 = vrot.slane %v641, 1
  %v656 = vsel %vm44, %v654, %v655
  %v657 = vrot.slane %v642, 1
  %v658 = vsel %vm44, %v655, %v657
  %659 = vrot.lane.b32.xlu0 %v651, 12
  %v660 = vpop.permute.xlu0 %659
  %661 = vrot.lane.b32.xlu0 %v653, 12
  %v662 = vpop.permute.xlu0 %661
  %663 = vrot.lane.b32.xlu0 %v656, 12
  %v664 = vpop.permute.xlu0 %663
  %665 = vrot.lane.b32.xlu0 %v658, 12
  %v666 = vpop.permute.xlu0 %665
  %v671 = vrot.slane %v637, 2
  %v672 = vrot.slane %v638, 2
  %v673 = vsel %vm67, %v671, %v672
  %v674 = vrot.slane %v639, 2
  %v675 = vsel %vm67, %v672, %v674
  %v676 = vrot.slane %v640, 2
  %v677 = vrot.slane %v641, 2
  %v678 = vsel %vm67, %v676, %v677
  %v679 = vrot.slane %v642, 2
  %v680 = vsel %vm67, %v677, %v679
  %681 = vrot.lane.b32.xlu0 %v673, 24
  %v682 = vpop.permute.xlu0 %681
  %683 = vrot.lane.b32.xlu0 %v675, 24
  %v684 = vpop.permute.xlu0 %683
  %685 = vrot.lane.b32.xlu0 %v678, 24
  %v686 = vpop.permute.xlu0 %685
  %687 = vrot.lane.b32.xlu0 %v680, 24
  %v688 = vpop.permute.xlu0 %687
  %v693 = vsel %vm90, %v637, %v660
  %v694 = vsel %vm90, %v638, %v662
  %v695 = vsel %vm90, %v640, %v664
  %v696 = vsel %vm90, %v641, %v666
  %v697 = vsel %vm95, %v693, %v682
  %v698 = vsel %vm95, %v694, %v684
  %v699 = vsel %vm95, %v695, %v686
  %v700 = vsel %vm95, %v696, %v688
  %s701 = scalar_lea.vmem %s0, 64
  %v702 = vld [vmem:[%s701] sm:$0xff]
  %v703 = vld [vmem:[%s701 + $0x8] sm:$0xff]
  %v704 = vld [vmem:[%s701 + $0x10] sm:$0xff]
  %v705 = vld [vmem:[%s701 + $0x18] sm:$0xff]
  %v707 = vsel %vm104, %v697, 0
  %v710 = vsel %vm104, %v698, 0
  %v713 = vsel %vm104, %v699, 0
  %v716 = vsel %vm104, %v700, 0
  %718 = vmatprep.subr.mxu0 0.0
  %719 = vmatpush1.msra.mxu0 0.0
  %720 = vmatprep.subr.mxu0 0.0
  %721 = vmatpush1.msra.mxu0 0.0
  %722 = vmatprep.subr.mxu0 0.0
  %723 = vmatpush1.msra.mxu0 0.0
  %724 = vmatprep.subr.mxu0 0.0
  %725 = vmatpush1.msra.mxu0 0.0
  %726 = vmatprep.subr.mxu0 0.0
  %727 = vmatpush1.msra.mxu0 0.0
  %728 = vmatprep.subr.mxu0 0.0
  %729 = vmatpush1.msra.mxu0 0.0
  %730 = vmatprep.subr.mxu0 0.0
  %731 = vmatpush1.msra.mxu0 0.0
  %732 = vmatprep.subr.mxu0 0.0
  %733 = vmatpush1.msra.mxu0 0.0
  %734 = vmatprep.subr.mxu0 0.0
  %735 = vmatpush1.msra.mxu0 0.0
  %736 = vmatprep.subr.mxu0 0.0
  %737 = vmatpush1.msra.mxu0 0.0
  %738 = vmatprep.subr.mxu0 0.0
  %739 = vmatpush1.msra.mxu0 0.0
  %740 = vmatprep.subr.mxu0 0.0
  %741 = vmatpush1.msra.mxu0 %v119
  %742 = vmatprep.subr.mxu0 0.0
  %743 = vmatpush1.msra.mxu0 %v30
  %744 = vmatprep.subr.mxu0 0.0
  %745 = vmatpush1.msra.mxu0 %v29
  %746 = vmatprep.subr.mxu0 0.0
  %747 = vmatpush1.msra.mxu0 %v28
  %748 = vmatprep.subr.mxu0 0.0
  %749 = vmatpush1.msra.mxu0 %v27
  %750 = vmatprep.subr.mxu0 0.0
  %751 = vmatpush2.msra.mxu0 0.0
  %752 = vmatprep.subr.mxu0 0.0
  %753 = vmatpush2.msra.mxu0 0.0
  %754 = vmatprep.subr.mxu0 0.0
  %755 = vmatpush2.msra.mxu0 0.0
  %756 = vmatprep.subr.mxu0 0.0
  %757 = vmatpush2.msra.mxu0 0.0
  %758 = vmatprep.subr.mxu0 0.0
  %759 = vmatpush2.msra.mxu0 0.0
  %760 = vmatprep.subr.mxu0 0.0
  %761 = vmatpush2.msra.mxu0 0.0
  %762 = vmatprep.subr.mxu0 0.0
  %763 = vmatpush2.msra.mxu0 0.0
  %764 = vmatprep.subr.mxu0 0.0
  %765 = vmatpush2.msra.mxu0 0.0
  %766 = vmatprep.subr.mxu0 0.0
  %767 = vmatpush2.msra.mxu0 0.0
  %768 = vmatprep.subr.mxu0 0.0
  %769 = vmatpush2.msra.mxu0 0.0
  %770 = vmatprep.subr.mxu0 0.0
  %771 = vmatpush2.msra.mxu0 0.0
  %772 = vmatprep.subr.mxu0 0.0
  %773 = vmatpush2.msra.mxu0 0.0
  %774 = vmatprep.subr.mxu0 0.0
  %775 = vmatpush2.msra.mxu0 0.0
  %776 = vmatprep.subr.mxu0 0.0
  %777 = vmatpush2.msra.mxu0 0.0
  %778 = vmatprep.subr.mxu0 0.0
  %779 = vmatpush2.msra.mxu0 0.0
  %780 = vmatprep.subr.mxu0 0.0
  %781 = vmatpush2.msra.mxu0 0.0
  %782 = vmatprep.mubr.f32.mxu0 0.0
  %783 = vmatmul.mubr.f32.gmra.mxu0 %v707
  %v784 = vpop.f32.mrf.mxu0
  %v785 = vadd.f32 0.0, %v784
  %v786 = vpop.f32.mrf.mxu0
  %787 = vmatprep.mubr.f32.mxu0 0.0
  %788 = vmatmul.mubr.f32.gmra.mxu0 %v710
  %v789 = vpop.f32.mrf.mxu0
  %v790 = vadd.f32 0.0, %v789
  %v791 = vpop.f32.mrf.mxu0
  %792 = vmatprep.mubr.f32.mxu0 0.0
  %793 = vmatmul.mubr.f32.gmra.mxu0 %v713
  %v794 = vpop.f32.mrf.mxu0
  %v795 = vadd.f32 0.0, %v794
  %v796 = vpop.f32.mrf.mxu0
  %797 = vmatprep.mubr.f32.mxu0 0.0
  %798 = vmatmul.mubr.f32.gmra.mxu0 %v716
  %v799 = vpop.f32.mrf.mxu0
  %v800 = vadd.f32 0.0, %v799
  %v801 = vpop.f32.mrf.mxu0
  %802 = vdwg.mxu0
  %v803 = vadd.f32 %v702, %v785
  %v804 = vadd.f32 %v703, %v790
  %v805 = vadd.f32 %v704, %v795
  %v806 = vadd.f32 %v705, %v800
  %v807 = vxor.u32 %v803, 2147483648
  %v808 = vxor.u32 %v804, 2147483648
  %v809 = vxor.u32 %v805, 2147483648
  %v810 = vxor.u32 %v806, 2147483648
  %v811 = vmul.f32 %v807, 1.442695
  %v812 = vpow.pop %v811
  %v813 = vmul.f32 %v808, 1.442695
  %v814 = vpow.pop %v813
  %v815 = vmul.f32 %v809, 1.442695
  %v816 = vpow.pop %v815
  %v817 = vmul.f32 %v810, 1.442695
  %v818 = vpow.pop %v817
  %v819 = vadd.f32 %v812, 1.0
  %v820 = vadd.f32 %v814, 1.0
  %v821 = vadd.f32 %v816, 1.0
  %v822 = vadd.f32 %v818, 1.0
  %v823 = vrcp.pop %v819
  %v824 = vmul.f32 1.0, %v823
  %v825 = vrcp.pop %v820
  %v826 = vmul.f32 1.0, %v825
  %v827 = vrcp.pop %v821
  %v828 = vmul.f32 1.0, %v827
  %v829 = vrcp.pop %v822
  %v830 = vmul.f32 1.0, %v829
  %v831 = vtanh.pop %v803
  %v832 = vtanh.pop %v804
  %v833 = vtanh.pop %v805
  %v834 = vtanh.pop %v806
  %v835 = vld [vmem:[#allocation3] sm:$0xff]
  %v836 = vld [vmem:[#allocation3 + $0x8] sm:$0xff]
  %v837 = vld [vmem:[#allocation3 + $0x10] sm:$0xff]
  %v838 = vld [vmem:[#allocation3 + $0x18] sm:$0xff]
  %v839 = vmul.f32 %v824, %v835
  %v840 = vmul.f32 %v826, %v836
  %v841 = vmul.f32 %v828, %v837
  %v842 = vmul.f32 %v830, %v838
  %847 = vrot.lane.b32.xlu0 %v831, 104
  %v848 = vpop.permute.xlu0 %847
  %849 = vrot.lane.b32.xlu0 %v832, 104
  %v850 = vpop.permute.xlu0 %849
  %851 = vrot.lane.b32.xlu0 %v833, 104
  %v852 = vpop.permute.xlu0 %851
  %853 = vrot.lane.b32.xlu0 %v834, 104
  %v854 = vpop.permute.xlu0 %853
  %v859 = vmul.f32 %v824, %v848
  %v860 = vmul.f32 %v826, %v850
  %v861 = vmul.f32 %v828, %v852
  %v862 = vmul.f32 %v830, %v854
  %867 = vrot.lane.b32.xlu0 %v859, 116
  %v868 = vpop.permute.xlu0 %867
  %869 = vrot.lane.b32.xlu0 %v860, 116
  %v870 = vpop.permute.xlu0 %869
  %871 = vrot.lane.b32.xlu0 %v861, 116
  %v872 = vpop.permute.xlu0 %871
  %873 = vrot.lane.b32.xlu0 %v862, 116
  %v874 = vpop.permute.xlu0 %873
  %v879 = vadd.f32 %v839, %v868
  %v880 = vadd.f32 %v840, %v870
  %v881 = vadd.f32 %v841, %v872
  %v882 = vadd.f32 %v842, %v874
  %v883 = vtanh.pop %v879
  %v884 = vtanh.pop %v880
  %v885 = vtanh.pop %v881
  %v886 = vtanh.pop %v882
  %891 = vrot.lane.b32.xlu0 %v883, 24
  %v892 = vpop.permute.xlu0 %891
  %893 = vrot.lane.b32.xlu0 %v884, 24
  %v894 = vpop.permute.xlu0 %893
  %895 = vrot.lane.b32.xlu0 %v885, 24
  %v896 = vpop.permute.xlu0 %895
  %897 = vrot.lane.b32.xlu0 %v886, 24
  %v898 = vpop.permute.xlu0 %897
  %v903 = vmul.f32 %v824, %v892
  %v904 = vmul.f32 %v826, %v894
  %v905 = vmul.f32 %v828, %v896
  %v906 = vmul.f32 %v830, %v898
  %907 = vst.msk [vmem:[#allocation3] sm:$0xff] %vm90, %v879
  %908 = vst.msk [vmem:[#allocation3 + $0x8] sm:$0xff] %vm90, %v880
  %909 = vst.msk [vmem:[#allocation3 + $0x10] sm:$0xff] %vm90, %v881
  %910 = vst.msk [vmem:[#allocation3 + $0x18] sm:$0xff] %vm90, %v882
  %915 = vrot.lane.b32.xlu0 %v903, 104
  %v916 = vpop.permute.xlu0 %915
  %917 = vrot.lane.b32.xlu0 %v904, 104
  %v918 = vpop.permute.xlu0 %917
  %919 = vrot.lane.b32.xlu0 %v905, 104
  %v920 = vpop.permute.xlu0 %919
  %921 = vrot.lane.b32.xlu0 %v906, 104
  %v922 = vpop.permute.xlu0 %921
  %927 = vst.msk [vmem:[#allocation2 + $0x1] sm:$0xff] %vm90, %v916
  %928 = vst.msk [vmem:[#allocation2 + $0x9] sm:$0xff] %vm90, %v918
  %929 = vst.msk [vmem:[#allocation2 + $0x19] sm:$0xff] %vm90, %v920
  %930 = vst.msk [vmem:[#allocation2 + $0x21] sm:$0xff] %vm90, %v922
  %s931 = scalar_lea.vmem %s2, 64
  %932 = vst.msk [vmem:[%s931] sm:$0xff] %vm90, %v916
  %933 = vst.msk [vmem:[%s931 + $0x8] sm:$0xff] %vm90, %v918
  %934 = vst.msk [vmem:[%s931 + $0x10] sm:$0xff] %vm90, %v920
  %935 = vst.msk [vmem:[%s931 + $0x18] sm:$0xff] %vm90, %v922
  %v936 = vld [vmem:[#allocation2] sm:$0xff]
  %v937 = vld [vmem:[#allocation2 + $0x8] sm:$0xff]
  %v938 = vld [vmem:[#allocation2 + $0x10] sm:$0x3]
  %v939 = vld [vmem:[#allocation2 + $0x18] sm:$0xff]
  %v940 = vld [vmem:[#allocation2 + $0x20] sm:$0xff]
  %v941 = vld [vmem:[#allocation2 + $0x28] sm:$0x3]
  %v948 = vrot.slane %v936, 1
  %v949 = vrot.slane %v937, 1
  %v950 = vsel %vm44, %v948, %v949
  %v951 = vrot.slane %v938, 1
  %v952 = vsel %vm44, %v949, %v951
  %v953 = vrot.slane %v939, 1
  %v954 = vrot.slane %v940, 1
  %v955 = vsel %vm44, %v953, %v954
  %v956 = vrot.slane %v941, 1
  %v957 = vsel %vm44, %v954, %v956
  %958 = vrot.lane.b32.xlu0 %v950, 12
  %v959 = vpop.permute.xlu0 %958
  %960 = vrot.lane.b32.xlu0 %v952, 12
  %v961 = vpop.permute.xlu0 %960
  %962 = vrot.lane.b32.xlu0 %v955, 12
  %v963 = vpop.permute.xlu0 %962
  %964 = vrot.lane.b32.xlu0 %v957, 12
  %v965 = vpop.permute.xlu0 %964
  %v970 = vrot.slane %v936, 2
  %v971 = vrot.slane %v937, 2
  %v972 = vsel %vm67, %v970, %v971
  %v973 = vrot.slane %v938, 2
  %v974 = vsel %vm67, %v971, %v973
  %v975 = vrot.slane %v939, 2
  %v976 = vrot.slane %v940, 2
  %v977 = vsel %vm67, %v975, %v976
  %v978 = vrot.slane %v941, 2
  %v979 = vsel %vm67, %v976, %v978
  %980 = vrot.lane.b32.xlu0 %v972, 24
  %v981 = vpop.permute.xlu0 %980
  %982 = vrot.lane.b32.xlu0 %v974, 24
  %v983 = vpop.permute.xlu0 %982
  %984 = vrot.lane.b32.xlu0 %v977, 24
  %v985 = vpop.permute.xlu0 %984
  %986 = vrot.lane.b32.xlu0 %v979, 24
  %v987 = vpop.permute.xlu0 %986
  %v992 = vsel %vm90, %v936, %v959
  %v993 = vsel %vm90, %v937, %v961
  %v994 = vsel %vm90, %v939, %v963
  %v995 = vsel %vm90, %v940, %v965
  %v996 = vsel %vm95, %v992, %v981
  %v997 = vsel %vm95, %v993, %v983
  %v998 = vsel %vm95, %v994, %v985
  %v999 = vsel %vm95, %v995, %v987
  %s1000 = scalar_lea.vmem %s0, 96
  %v1001 = vld [vmem:[%s1000] sm:$0xff]
  %v1002 = vld [vmem:[%s1000 + $0x8] sm:$0xff]
  %v1003 = vld [vmem:[%s1000 + $0x10] sm:$0xff]
  %v1004 = vld [vmem:[%s1000 + $0x18] sm:$0xff]
  %v1006 = vsel %vm104, %v996, 0
  %v1009 = vsel %vm104, %v997, 0
  %v1012 = vsel %vm104, %v998, 0
  %v1015 = vsel %vm104, %v999, 0
  %1017 = vmatprep.subr.mxu0 0.0
  %1018 = vmatpush1.msra.mxu0 0.0
  %1019 = vmatprep.subr.mxu0 0.0
  %1020 = vmatpush1.msra.mxu0 0.0
  %1021 = vmatprep.subr.mxu0 0.0
  %1022 = vmatpush1.msra.mxu0 0.0
  %1023 = vmatprep.subr.mxu0 0.0
  %1024 = vmatpush1.msra.mxu0 0.0
  %1025 = vmatprep.subr.mxu0 0.0
  %1026 = vmatpush1.msra.mxu0 0.0
  %1027 = vmatprep.subr.mxu0 0.0
  %1028 = vmatpush1.msra.mxu0 0.0
  %1029 = vmatprep.subr.mxu0 0.0
  %1030 = vmatpush1.msra.mxu0 0.0
  %1031 = vmatprep.subr.mxu0 0.0
  %1032 = vmatpush1.msra.mxu0 0.0
  %1033 = vmatprep.subr.mxu0 0.0
  %1034 = vmatpush1.msra.mxu0 0.0
  %1035 = vmatprep.subr.mxu0 0.0
  %1036 = vmatpush1.msra.mxu0 0.0
  %1037 = vmatprep.subr.mxu0 0.0
  %1038 = vmatpush1.msra.mxu0 0.0
  %1039 = vmatprep.subr.mxu0 0.0
  %1040 = vmatpush1.msra.mxu0 %v119
  %1041 = vmatprep.subr.mxu0 0.0
  %1042 = vmatpush1.msra.mxu0 %v30
  %1043 = vmatprep.subr.mxu0 0.0
  %1044 = vmatpush1.msra.mxu0 %v29
  %1045 = vmatprep.subr.mxu0 0.0
  %1046 = vmatpush1.msra.mxu0 %v28
  %1047 = vmatprep.subr.mxu0 0.0
  %1048 = vmatpush1.msra.mxu0 %v27
  %1049 = vmatprep.subr.mxu0 0.0
  %1050 = vmatpush2.msra.mxu0 0.0
  %1051 = vmatprep.subr.mxu0 0.0
  %1052 = vmatpush2.msra.mxu0 0.0
  %1053 = vmatprep.subr.mxu0 0.0
  %1054 = vmatpush2.msra.mxu0 0.0
  %1055 = vmatprep.subr.mxu0 0.0
  %1056 = vmatpush2.msra.mxu0 0.0
  %1057 = vmatprep.subr.mxu0 0.0
  %1058 = vmatpush2.msra.mxu0 0.0
  %1059 = vmatprep.subr.mxu0 0.0
  %1060 = vmatpush2.msra.mxu0 0.0
  %1061 = vmatprep.subr.mxu0 0.0
  %1062 = vmatpush2.msra.mxu0 0.0
  %1063 = vmatprep.subr.mxu0 0.0
  %1064 = vmatpush2.msra.mxu0 0.0
  %1065 = vmatprep.subr.mxu0 0.0
  %1066 = vmatpush2.msra.mxu0 0.0
  %1067 = vmatprep.subr.mxu0 0.0
  %1068 = vmatpush2.msra.mxu0 0.0
  %1069 = vmatprep.subr.mxu0 0.0
  %1070 = vmatpush2.msra.mxu0 0.0
  %1071 = vmatprep.subr.mxu0 0.0
  %1072 = vmatpush2.msra.mxu0 0.0
  %1073 = vmatprep.subr.mxu0 0.0
  %1074 = vmatpush2.msra.mxu0 0.0
  %1075 = vmatprep.subr.mxu0 0.0
  %1076 = vmatpush2.msra.mxu0 0.0
  %1077 = vmatprep.subr.mxu0 0.0
  %1078 = vmatpush2.msra.mxu0 0.0
  %1079 = vmatprep.subr.mxu0 0.0
  %1080 = vmatpush2.msra.mxu0 0.0
  %1081 = vmatprep.mubr.f32.mxu0 0.0
  %1082 = vmatmul.mubr.f32.gmra.mxu0 %v1006
  %v1083 = vpop.f32.mrf.mxu0
  %v1084 = vadd.f32 0.0, %v1083
  %v1085 = vpop.f32.mrf.mxu0
  %1086 = vmatprep.mubr.f32.mxu0 0.0
  %1087 = vmatmul.mubr.f32.gmra.mxu0 %v1009
  %v1088 = vpop.f32.mrf.mxu0
  %v1089 = vadd.f32 0.0, %v1088
  %v1090 = vpop.f32.mrf.mxu0
  %1091 = vmatprep.mubr.f32.mxu0 0.0
  %1092 = vmatmul.mubr.f32.gmra.mxu0 %v1012
  %v1093 = vpop.f32.mrf.mxu0
  %v1094 = vadd.f32 0.0, %v1093
  %v1095 = vpop.f32.mrf.mxu0
  %1096 = vmatprep.mubr.f32.mxu0 0.0
  %1097 = vmatmul.mubr.f32.gmra.mxu0 %v1015
  %v1098 = vpop.f32.mrf.mxu0
  %v1099 = vadd.f32 0.0, %v1098
  %v1100 = vpop.f32.mrf.mxu0
  %1101 = vdwg.mxu0
  %v1102 = vadd.f32 %v1001, %v1084
  %v1103 = vadd.f32 %v1002, %v1089
  %v1104 = vadd.f32 %v1003, %v1094
  %v1105 = vadd.f32 %v1004, %v1099
  %v1106 = vxor.u32 %v1102, 2147483648
  %v1107 = vxor.u32 %v1103, 2147483648
  %v1108 = vxor.u32 %v1104, 2147483648
  %v1109 = vxor.u32 %v1105, 2147483648
  %v1110 = vmul.f32 %v1106, 1.442695
  %v1111 = vpow.pop %v1110
  %v1112 = vmul.f32 %v1107, 1.442695
  %v1113 = vpow.pop %v1112
  %v1114 = vmul.f32 %v1108, 1.442695
  %v1115 = vpow.pop %v1114
  %v1116 = vmul.f32 %v1109, 1.442695
  %v1117 = vpow.pop %v1116
  %v1118 = vadd.f32 %v1111, 1.0
  %v1119 = vadd.f32 %v1113, 1.0
  %v1120 = vadd.f32 %v1115, 1.0
  %v1121 = vadd.f32 %v1117, 1.0
  %v1122 = vrcp.pop %v1118
  %v1123 = vmul.f32 1.0, %v1122
  %v1124 = vrcp.pop %v1119
  %v1125 = vmul.f32 1.0, %v1124
  %v1126 = vrcp.pop %v1120
  %v1127 = vmul.f32 1.0, %v1126
  %v1128 = vrcp.pop %v1121
  %v1129 = vmul.f32 1.0, %v1128
  %v1130 = vtanh.pop %v1102
  %v1131 = vtanh.pop %v1103
  %v1132 = vtanh.pop %v1104
  %v1133 = vtanh.pop %v1105
  %v1134 = vld [vmem:[#allocation3] sm:$0xff]
  %v1135 = vld [vmem:[#allocation3 + $0x8] sm:$0xff]
  %v1136 = vld [vmem:[#allocation3 + $0x10] sm:$0xff]
  %v1137 = vld [vmem:[#allocation3 + $0x18] sm:$0xff]
  %v1138 = vmul.f32 %v1123, %v1134
  %v1139 = vmul.f32 %v1125, %v1135
  %v1140 = vmul.f32 %v1127, %v1136
  %v1141 = vmul.f32 %v1129, %v1137
  %1146 = vrot.lane.b32.xlu0 %v1130, 104
  %v1147 = vpop.permute.xlu0 %1146
  %1148 = vrot.lane.b32.xlu0 %v1131, 104
  %v1149 = vpop.permute.xlu0 %1148
  %1150 = vrot.lane.b32.xlu0 %v1132, 104
  %v1151 = vpop.permute.xlu0 %1150
  %1152 = vrot.lane.b32.xlu0 %v1133, 104
  %v1153 = vpop.permute.xlu0 %1152
  %v1158 = vmul.f32 %v1123, %v1147
  %v1159 = vmul.f32 %v1125, %v1149
  %v1160 = vmul.f32 %v1127, %v1151
  %v1161 = vmul.f32 %v1129, %v1153
  %1166 = vrot.lane.b32.xlu0 %v1158, 116
  %v1167 = vpop.permute.xlu0 %1166
  %1168 = vrot.lane.b32.xlu0 %v1159, 116
  %v1169 = vpop.permute.xlu0 %1168
  %1170 = vrot.lane.b32.xlu0 %v1160, 116
  %v1171 = vpop.permute.xlu0 %1170
  %1172 = vrot.lane.b32.xlu0 %v1161, 116
  %v1173 = vpop.permute.xlu0 %1172
  %v1178 = vadd.f32 %v1138, %v1167
  %v1179 = vadd.f32 %v1139, %v1169
  %v1180 = vadd.f32 %v1140, %v1171
  %v1181 = vadd.f32 %v1141, %v1173
  %v1182 = vtanh.pop %v1178
  %v1183 = vtanh.pop %v1179
  %v1184 = vtanh.pop %v1180
  %v1185 = vtanh.pop %v1181
  %1190 = vrot.lane.b32.xlu0 %v1182, 24
  %v1191 = vpop.permute.xlu0 %1190
  %1192 = vrot.lane.b32.xlu0 %v1183, 24
  %v1193 = vpop.permute.xlu0 %1192
  %1194 = vrot.lane.b32.xlu0 %v1184, 24
  %v1195 = vpop.permute.xlu0 %1194
  %1196 = vrot.lane.b32.xlu0 %v1185, 24
  %v1197 = vpop.permute.xlu0 %1196
  %v1202 = vmul.f32 %v1123, %v1191
  %v1203 = vmul.f32 %v1125, %v1193
  %v1204 = vmul.f32 %v1127, %v1195
  %v1205 = vmul.f32 %v1129, %v1197
  %1206 = vst.msk [vmem:[#allocation3] sm:$0xff] %vm90, %v1178
  %1207 = vst.msk [vmem:[#allocation3 + $0x8] sm:$0xff] %vm90, %v1179
  %1208 = vst.msk [vmem:[#allocation3 + $0x10] sm:$0xff] %vm90, %v1180
  %1209 = vst.msk [vmem:[#allocation3 + $0x18] sm:$0xff] %vm90, %v1181
  %1214 = vrot.lane.b32.xlu0 %v1202, 104
  %v1215 = vpop.permute.xlu0 %1214
  %1216 = vrot.lane.b32.xlu0 %v1203, 104
  %v1217 = vpop.permute.xlu0 %1216
  %1218 = vrot.lane.b32.xlu0 %v1204, 104
  %v1219 = vpop.permute.xlu0 %1218
  %1220 = vrot.lane.b32.xlu0 %v1205, 104
  %v1221 = vpop.permute.xlu0 %1220
  %1226 = vst.msk [vmem:[#allocation2 + $0x1] sm:$0xff] %vm90, %v1215
  %1227 = vst.msk [vmem:[#allocation2 + $0x9] sm:$0xff] %vm90, %v1217
  %1228 = vst.msk [vmem:[#allocation2 + $0x19] sm:$0xff] %vm90, %v1219
  %1229 = vst.msk [vmem:[#allocation2 + $0x21] sm:$0xff] %vm90, %v1221
  %s1230 = scalar_lea.vmem %s2, 96
  %1231 = vst.msk [vmem:[%s1230] sm:$0xff] %vm90, %v1215
  %1232 = vst.msk [vmem:[%s1230 + $0x8] sm:$0xff] %vm90, %v1217
  %1233 = vst.msk [vmem:[%s1230 + $0x10] sm:$0xff] %vm90, %v1219
  %1234 = vst.msk [vmem:[%s1230 + $0x18] sm:$0xff] %vm90, %v1221
  %v1235 = vld [vmem:[#allocation2] sm:$0xff]
  %v1236 = vld [vmem:[#allocation2 + $0x8] sm:$0xff]
  %v1237 = vld [vmem:[#allocation2 + $0x10] sm:$0x3]
  %v1238 = vld [vmem:[#allocation2 + $0x18] sm:$0xff]
  %v1239 = vld [vmem:[#allocation2 + $0x20] sm:$0xff]
  %v1240 = vld [vmem:[#allocation2 + $0x28] sm:$0x3]
  %v1247 = vrot.slane %v1235, 1
  %v1248 = vrot.slane %v1236, 1
  %v1249 = vsel %vm44, %v1247, %v1248
  %v1250 = vrot.slane %v1237, 1
  %v1251 = vsel %vm44, %v1248, %v1250
  %v1252 = vrot.slane %v1238, 1
  %v1253 = vrot.slane %v1239, 1
  %v1254 = vsel %vm44, %v1252, %v1253
  %v1255 = vrot.slane %v1240, 1
  %v1256 = vsel %vm44, %v1253, %v1255
  %1257 = vrot.lane.b32.xlu0 %v1249, 12
  %v1258 = vpop.permute.xlu0 %1257
  %1259 = vrot.lane.b32.xlu0 %v1251, 12
  %v1260 = vpop.permute.xlu0 %1259
  %1261 = vrot.lane.b32.xlu0 %v1254, 12
  %v1262 = vpop.permute.xlu0 %1261
  %1263 = vrot.lane.b32.xlu0 %v1256, 12
  %v1264 = vpop.permute.xlu0 %1263
  %v1269 = vrot.slane %v1235, 2
  %v1270 = vrot.slane %v1236, 2
  %v1271 = vsel %vm67, %v1269, %v1270
  %v1272 = vrot.slane %v1237, 2
  %v1273 = vsel %vm67, %v1270, %v1272
  %v1274 = vrot.slane %v1238, 2
  %v1275 = vrot.slane %v1239, 2
  %v1276 = vsel %vm67, %v1274, %v1275
  %v1277 = vrot.slane %v1240, 2
  %v1278 = vsel %vm67, %v1275, %v1277
  %1279 = vrot.lane.b32.xlu0 %v1271, 24
  %v1280 = vpop.permute.xlu0 %1279
  %1281 = vrot.lane.b32.xlu0 %v1273, 24
  %v1282 = vpop.permute.xlu0 %1281
  %1283 = vrot.lane.b32.xlu0 %v1276, 24
  %v1284 = vpop.permute.xlu0 %1283
  %1285 = vrot.lane.b32.xlu0 %v1278, 24
  %v1286 = vpop.permute.xlu0 %1285
  %v1291 = vsel %vm90, %v1235, %v1258
  %v1292 = vsel %vm90, %v1236, %v1260
  %v1293 = vsel %vm90, %v1238, %v1262
  %v1294 = vsel %vm90, %v1239, %v1264
  %v1295 = vsel %vm95, %v1291, %v1280
  %v1296 = vsel %vm95, %v1292, %v1282
  %v1297 = vsel %vm95, %v1293, %v1284
  %v1298 = vsel %vm95, %v1294, %v1286
  %s1299 = scalar_lea.vmem %s0, 128
  %v1300 = vld [vmem:[%s1299] sm:$0xff]
  %v1301 = vld [vmem:[%s1299 + $0x8] sm:$0xff]
  %v1302 = vld [vmem:[%s1299 + $0x10] sm:$0xff]
  %v1303 = vld [vmem:[%s1299 + $0x18] sm:$0xff]
  %v1305 = vsel %vm104, %v1295, 0
  %v1308 = vsel %vm104, %v1296, 0
  %v1311 = vsel %vm104, %v1297, 0
  %v1314 = vsel %vm104, %v1298, 0
  %1316 = vmatprep.subr.mxu0 0.0
  %1317 = vmatpush1.msra.mxu0 0.0
  %1318 = vmatprep.subr.mxu0 0.0
  %1319 = vmatpush1.msra.mxu0 0.0
  %1320 = vmatprep.subr.mxu0 0.0
  %1321 = vmatpush1.msra.mxu0 0.0
  %1322 = vmatprep.subr.mxu0 0.0
  %1323 = vmatpush1.msra.mxu0 0.0
  %1324 = vmatprep.subr.mxu0 0.0
  %1325 = vmatpush1.msra.mxu0 0.0
  %1326 = vmatprep.subr.mxu0 0.0
  %1327 = vmatpush1.msra.mxu0 0.0
  %1328 = vmatprep.subr.mxu0 0.0
  %1329 = vmatpush1.msra.mxu0 0.0
  %1330 = vmatprep.subr.mxu0 0.0
  %1331 = vmatpush1.msra.mxu0 0.0
  %1332 = vmatprep.subr.mxu0 0.0
  %1333 = vmatpush1.msra.mxu0 0.0
  %1334 = vmatprep.subr.mxu0 0.0
  %1335 = vmatpush1.msra.mxu0 0.0
  %1336 = vmatprep.subr.mxu0 0.0
  %1337 = vmatpush1.msra.mxu0 0.0
  %1338 = vmatprep.subr.mxu0 0.0
  %1339 = vmatpush1.msra.mxu0 %v119
  %1340 = vmatprep.subr.mxu0 0.0
  %1341 = vmatpush1.msra.mxu0 %v30
  %1342 = vmatprep.subr.mxu0 0.0
  %1343 = vmatpush1.msra.mxu0 %v29
  %1344 = vmatprep.subr.mxu0 0.0
  %1345 = vmatpush1.msra.mxu0 %v28
  %1346 = vmatprep.subr.mxu0 0.0
  %1347 = vmatpush1.msra.mxu0 %v27
  %1348 = vmatprep.subr.mxu0 0.0
  %1349 = vmatpush2.msra.mxu0 0.0
  %1350 = vmatprep.subr.mxu0 0.0
  %1351 = vmatpush2.msra.mxu0 0.0
  %1352 = vmatprep.subr.mxu0 0.0
  %1353 = vmatpush2.msra.mxu0 0.0
  %1354 = vmatprep.subr.mxu0 0.0
  %1355 = vmatpush2.msra.mxu0 0.0
  %1356 = vmatprep.subr.mxu0 0.0
  %1357 = vmatpush2.msra.mxu0 0.0
  %1358 = vmatprep.subr.mxu0 0.0
  %1359 = vmatpush2.msra.mxu0 0.0
  %1360 = vmatprep.subr.mxu0 0.0
  %1361 = vmatpush2.msra.mxu0 0.0
  %1362 = vmatprep.subr.mxu0 0.0
  %1363 = vmatpush2.msra.mxu0 0.0
  %1364 = vmatprep.subr.mxu0 0.0
  %1365 = vmatpush2.msra.mxu0 0.0
  %1366 = vmatprep.subr.mxu0 0.0
  %1367 = vmatpush2.msra.mxu0 0.0
  %1368 = vmatprep.subr.mxu0 0.0
  %1369 = vmatpush2.msra.mxu0 0.0
  %1370 = vmatprep.subr.mxu0 0.0
  %1371 = vmatpush2.msra.mxu0 0.0
  %1372 = vmatprep.subr.mxu0 0.0
  %1373 = vmatpush2.msra.mxu0 0.0
  %1374 = vmatprep.subr.mxu0 0.0
  %1375 = vmatpush2.msra.mxu0 0.0
  %1376 = vmatprep.subr.mxu0 0.0
  %1377 = vmatpush2.msra.mxu0 0.0
  %1378 = vmatprep.subr.mxu0 0.0
  %1379 = vmatpush2.msra.mxu0 0.0
  %1380 = vmatprep.mubr.f32.mxu0 0.0
  %1381 = vmatmul.mubr.f32.gmra.mxu0 %v1305
  %v1382 = vpop.f32.mrf.mxu0
  %v1383 = vadd.f32 0.0, %v1382
  %v1384 = vpop.f32.mrf.mxu0
  %1385 = vmatprep.mubr.f32.mxu0 0.0
  %1386 = vmatmul.mubr.f32.gmra.mxu0 %v1308
  %v1387 = vpop.f32.mrf.mxu0
  %v1388 = vadd.f32 0.0, %v1387
  %v1389 = vpop.f32.mrf.mxu0
  %1390 = vmatprep.mubr.f32.mxu0 0.0
  %1391 = vmatmul.mubr.f32.gmra.mxu0 %v1311
  %v1392 = vpop.f32.mrf.mxu0
  %v1393 = vadd.f32 0.0, %v1392
  %v1394 = vpop.f32.mrf.mxu0
  %1395 = vmatprep.mubr.f32.mxu0 0.0
  %1396 = vmatmul.mubr.f32.gmra.mxu0 %v1314
  %v1397 = vpop.f32.mrf.mxu0
  %v1398 = vadd.f32 0.0, %v1397
  %v1399 = vpop.f32.mrf.mxu0
  %1400 = vdwg.mxu0
  %v1401 = vadd.f32 %v1300, %v1383
  %v1402 = vadd.f32 %v1301, %v1388
  %v1403 = vadd.f32 %v1302, %v1393
  %v1404 = vadd.f32 %v1303, %v1398
  %v1405 = vxor.u32 %v1401, 2147483648
  %v1406 = vxor.u32 %v1402, 2147483648
  %v1407 = vxor.u32 %v1403, 2147483648
  %v1408 = vxor.u32 %v1404, 2147483648
  %v1409 = vmul.f32 %v1405, 1.442695
  %v1410 = vpow.pop %v1409
  %v1411 = vmul.f32 %v1406, 1.442695
  %v1412 = vpow.pop %v1411
  %v1413 = vmul.f32 %v1407, 1.442695
  %v1414 = vpow.pop %v1413
  %v1415 = vmul.f32 %v1408, 1.442695
  %v1416 = vpow.pop %v1415
  %v1417 = vadd.f32 %v1410, 1.0
  %v1418 = vadd.f32 %v1412, 1.0
  %v1419 = vadd.f32 %v1414, 1.0
  %v1420 = vadd.f32 %v1416, 1.0
  %v1421 = vrcp.pop %v1417
  %v1422 = vmul.f32 1.0, %v1421
  %v1423 = vrcp.pop %v1418
  %v1424 = vmul.f32 1.0, %v1423
  %v1425 = vrcp.pop %v1419
  %v1426 = vmul.f32 1.0, %v1425
  %v1427 = vrcp.pop %v1420
  %v1428 = vmul.f32 1.0, %v1427
  %v1429 = vtanh.pop %v1401
  %v1430 = vtanh.pop %v1402
  %v1431 = vtanh.pop %v1403
  %v1432 = vtanh.pop %v1404
  %v1433 = vld [vmem:[#allocation3] sm:$0xff]
  %v1434 = vld [vmem:[#allocation3 + $0x8] sm:$0xff]
  %v1435 = vld [vmem:[#allocation3 + $0x10] sm:$0xff]
  %v1436 = vld [vmem:[#allocation3 + $0x18] sm:$0xff]
  %v1437 = vmul.f32 %v1422, %v1433
  %v1438 = vmul.f32 %v1424, %v1434
  %v1439 = vmul.f32 %v1426, %v1435
  %v1440 = vmul.f32 %v1428, %v1436
  %1445 = vrot.lane.b32.xlu0 %v1429, 104
  %v1446 = vpop.permute.xlu0 %1445
  %1447 = vrot.lane.b32.xlu0 %v1430, 104
  %v1448 = vpop.permute.xlu0 %1447
  %1449 = vrot.lane.b32.xlu0 %v1431, 104
  %v1450 = vpop.permute.xlu0 %1449
  %1451 = vrot.lane.b32.xlu0 %v1432, 104
  %v1452 = vpop.permute.xlu0 %1451
  %v1457 = vmul.f32 %v1422, %v1446
  %v1458 = vmul.f32 %v1424, %v1448
  %v1459 = vmul.f32 %v1426, %v1450
  %v1460 = vmul.f32 %v1428, %v1452
  %1465 = vrot.lane.b32.xlu0 %v1457, 116
  %v1466 = vpop.permute.xlu0 %1465
  %1467 = vrot.lane.b32.xlu0 %v1458, 116
  %v1468 = vpop.permute.xlu0 %1467
  %1469 = vrot.lane.b32.xlu0 %v1459, 116
  %v1470 = vpop.permute.xlu0 %1469
  %1471 = vrot.lane.b32.xlu0 %v1460, 116
  %v1472 = vpop.permute.xlu0 %1471
  %v1477 = vadd.f32 %v1437, %v1466
  %v1478 = vadd.f32 %v1438, %v1468
  %v1479 = vadd.f32 %v1439, %v1470
  %v1480 = vadd.f32 %v1440, %v1472
  %v1481 = vtanh.pop %v1477
  %v1482 = vtanh.pop %v1478
  %v1483 = vtanh.pop %v1479
  %v1484 = vtanh.pop %v1480
  %1489 = vrot.lane.b32.xlu0 %v1481, 24
  %v1490 = vpop.permute.xlu0 %1489
  %1491 = vrot.lane.b32.xlu0 %v1482, 24
  %v1492 = vpop.permute.xlu0 %1491
  %1493 = vrot.lane.b32.xlu0 %v1483, 24
  %v1494 = vpop.permute.xlu0 %1493
  %1495 = vrot.lane.b32.xlu0 %v1484, 24
  %v1496 = vpop.permute.xlu0 %1495
  %v1501 = vmul.f32 %v1422, %v1490
  %v1502 = vmul.f32 %v1424, %v1492
  %v1503 = vmul.f32 %v1426, %v1494
  %v1504 = vmul.f32 %v1428, %v1496
  %1505 = vst.msk [vmem:[#allocation3] sm:$0xff] %vm90, %v1477
  %1506 = vst.msk [vmem:[#allocation3 + $0x8] sm:$0xff] %vm90, %v1478
  %1507 = vst.msk [vmem:[#allocation3 + $0x10] sm:$0xff] %vm90, %v1479
  %1508 = vst.msk [vmem:[#allocation3 + $0x18] sm:$0xff] %vm90, %v1480
  %1513 = vrot.lane.b32.xlu0 %v1501, 104
  %v1514 = vpop.permute.xlu0 %1513
  %1515 = vrot.lane.b32.xlu0 %v1502, 104
  %v1516 = vpop.permute.xlu0 %1515
  %1517 = vrot.lane.b32.xlu0 %v1503, 104
  %v1518 = vpop.permute.xlu0 %1517
  %1519 = vrot.lane.b32.xlu0 %v1504, 104
  %v1520 = vpop.permute.xlu0 %1519
  %1525 = vst.msk [vmem:[#allocation2 + $0x1] sm:$0xff] %vm90, %v1514
  %1526 = vst.msk [vmem:[#allocation2 + $0x9] sm:$0xff] %vm90, %v1516
  %1527 = vst.msk [vmem:[#allocation2 + $0x19] sm:$0xff] %vm90, %v1518
  %1528 = vst.msk [vmem:[#allocation2 + $0x21] sm:$0xff] %vm90, %v1520
  %s1529 = scalar_lea.vmem %s2, 128
  %1530 = vst.msk [vmem:[%s1529] sm:$0xff] %vm90, %v1514
  %1531 = vst.msk [vmem:[%s1529 + $0x8] sm:$0xff] %vm90, %v1516
  %1532 = vst.msk [vmem:[%s1529 + $0x10] sm:$0xff] %vm90, %v1518
  %1533 = vst.msk [vmem:[%s1529 + $0x18] sm:$0xff] %vm90, %v1520
  %v1534 = vld [vmem:[#allocation2] sm:$0xff]
  %v1535 = vld [vmem:[#allocation2 + $0x8] sm:$0xff]
  %v1536 = vld [vmem:[#allocation2 + $0x10] sm:$0x3]
  %v1537 = vld [vmem:[#allocation2 + $0x18] sm:$0xff]
  %v1538 = vld [vmem:[#allocation2 + $0x20] sm:$0xff]
  %v1539 = vld [vmem:[#allocation2 + $0x28] sm:$0x3]
  %v1546 = vrot.slane %v1534, 1
  %v1547 = vrot.slane %v1535, 1
  %v1548 = vsel %vm44, %v1546, %v1547
  %v1549 = vrot.slane %v1536, 1
  %v1550 = vsel %vm44, %v1547, %v1549
  %v1551 = vrot.slane %v1537, 1
  %v1552 = vrot.slane %v1538, 1
  %v1553 = vsel %vm44, %v1551, %v1552
  %v1554 = vrot.slane %v1539, 1
  %v1555 = vsel %vm44, %v1552, %v1554
  %1556 = vrot.lane.b32.xlu0 %v1548, 12
  %v1557 = vpop.permute.xlu0 %1556
  %1558 = vrot.lane.b32.xlu0 %v1550, 12
  %v1559 = vpop.permute.xlu0 %1558
  %1560 = vrot.lane.b32.xlu0 %v1553, 12
  %v1561 = vpop.permute.xlu0 %1560
  %1562 = vrot.lane.b32.xlu0 %v1555, 12
  %v1563 = vpop.permute.xlu0 %1562
  %v1568 = vrot.slane %v1534, 2
  %v1569 = vrot.slane %v1535, 2
  %v1570 = vsel %vm67, %v1568, %v1569
  %v1571 = vrot.slane %v1536, 2
  %v1572 = vsel %vm67, %v1569, %v1571
  %v1573 = vrot.slane %v1537, 2
  %v1574 = vrot.slane %v1538, 2
  %v1575 = vsel %vm67, %v1573, %v1574
  %v1576 = vrot.slane %v1539, 2
  %v1577 = vsel %vm67, %v1574, %v1576
  %1578 = vrot.lane.b32.xlu0 %v1570, 24
  %v1579 = vpop.permute.xlu0 %1578
  %1580 = vrot.lane.b32.xlu0 %v1572, 24
  %v1581 = vpop.permute.xlu0 %1580
  %1582 = vrot.lane.b32.xlu0 %v1575, 24
  %v1583 = vpop.permute.xlu0 %1582
  %1584 = vrot.lane.b32.xlu0 %v1577, 24
  %v1585 = vpop.permute.xlu0 %1584
  %v1590 = vsel %vm90, %v1534, %v1557
  %v1591 = vsel %vm90, %v1535, %v1559
  %v1592 = vsel %vm90, %v1537, %v1561
  %v1593 = vsel %vm90, %v1538, %v1563
  %v1594 = vsel %vm95, %v1590, %v1579
  %v1595 = vsel %vm95, %v1591, %v1581
  %v1596 = vsel %vm95, %v1592, %v1583
  %v1597 = vsel %vm95, %v1593, %v1585
  %s1598 = scalar_lea.vmem %s0, 160
  %v1599 = vld [vmem:[%s1598] sm:$0xff]
  %v1600 = vld [vmem:[%s1598 + $0x8] sm:$0xff]
  %v1601 = vld [vmem:[%s1598 + $0x10] sm:$0xff]
  %v1602 = vld [vmem:[%s1598 + $0x18] sm:$0xff]
  %v1604 = vsel %vm104, %v1594, 0
  %v1607 = vsel %vm104, %v1595, 0
  %v1610 = vsel %vm104, %v1596, 0
  %v1613 = vsel %vm104, %v1597, 0
  %1615 = vmatprep.subr.mxu0 0.0
  %1616 = vmatpush1.msra.mxu0 0.0
  %1617 = vmatprep.subr.mxu0 0.0
  %1618 = vmatpush1.msra.mxu0 0.0
  %1619 = vmatprep.subr.mxu0 0.0
  %1620 = vmatpush1.msra.mxu0 0.0
  %1621 = vmatprep.subr.mxu0 0.0
  %1622 = vmatpush1.msra.mxu0 0.0
  %1623 = vmatprep.subr.mxu0 0.0
  %1624 = vmatpush1.msra.mxu0 0.0
  %1625 = vmatprep.subr.mxu0 0.0
  %1626 = vmatpush1.msra.mxu0 0.0
  %1627 = vmatprep.subr.mxu0 0.0
  %1628 = vmatpush1.msra.mxu0 0.0
  %1629 = vmatprep.subr.mxu0 0.0
  %1630 = vmatpush1.msra.mxu0 0.0
  %1631 = vmatprep.subr.mxu0 0.0
  %1632 = vmatpush1.msra.mxu0 0.0
  %1633 = vmatprep.subr.mxu0 0.0
  %1634 = vmatpush1.msra.mxu0 0.0
  %1635 = vmatprep.subr.mxu0 0.0
  %1636 = vmatpush1.msra.mxu0 0.0
  %1637 = vmatprep.subr.mxu0 0.0
  %1638 = vmatpush1.msra.mxu0 %v119
  %1639 = vmatprep.subr.mxu0 0.0
  %1640 = vmatpush1.msra.mxu0 %v30
  %1641 = vmatprep.subr.mxu0 0.0
  %1642 = vmatpush1.msra.mxu0 %v29
  %1643 = vmatprep.subr.mxu0 0.0
  %1644 = vmatpush1.msra.mxu0 %v28
  %1645 = vmatprep.subr.mxu0 0.0
  %1646 = vmatpush1.msra.mxu0 %v27
  %1647 = vmatprep.subr.mxu0 0.0
  %1648 = vmatpush2.msra.mxu0 0.0
  %1649 = vmatprep.subr.mxu0 0.0
  %1650 = vmatpush2.msra.mxu0 0.0
  %1651 = vmatprep.subr.mxu0 0.0
  %1652 = vmatpush2.msra.mxu0 0.0
  %1653 = vmatprep.subr.mxu0 0.0
  %1654 = vmatpush2.msra.mxu0 0.0
  %1655 = vmatprep.subr.mxu0 0.0
  %1656 = vmatpush2.msra.mxu0 0.0
  %1657 = vmatprep.subr.mxu0 0.0
  %1658 = vmatpush2.msra.mxu0 0.0
  %1659 = vmatprep.subr.mxu0 0.0
  %1660 = vmatpush2.msra.mxu0 0.0
  %1661 = vmatprep.subr.mxu0 0.0
  %1662 = vmatpush2.msra.mxu0 0.0
  %1663 = vmatprep.subr.mxu0 0.0
  %1664 = vmatpush2.msra.mxu0 0.0
  %1665 = vmatprep.subr.mxu0 0.0
  %1666 = vmatpush2.msra.mxu0 0.0
  %1667 = vmatprep.subr.mxu0 0.0
  %1668 = vmatpush2.msra.mxu0 0.0
  %1669 = vmatprep.subr.mxu0 0.0
  %1670 = vmatpush2.msra.mxu0 0.0
  %1671 = vmatprep.subr.mxu0 0.0
  %1672 = vmatpush2.msra.mxu0 0.0
  %1673 = vmatprep.subr.mxu0 0.0
  %1674 = vmatpush2.msra.mxu0 0.0
  %1675 = vmatprep.subr.mxu0 0.0
  %1676 = vmatpush2.msra.mxu0 0.0
  %1677 = vmatprep.subr.mxu0 0.0
  %1678 = vmatpush2.msra.mxu0 0.0
  %1679 = vmatprep.mubr.f32.mxu0 0.0
  %1680 = vmatmul.mubr.f32.gmra.mxu0 %v1604
  %v1681 = vpop.f32.mrf.mxu0
  %v1682 = vadd.f32 0.0, %v1681
  %v1683 = vpop.f32.mrf.mxu0
  %1684 = vmatprep.mubr.f32.mxu0 0.0
  %1685 = vmatmul.mubr.f32.gmra.mxu0 %v1607
  %v1686 = vpop.f32.mrf.mxu0
  %v1687 = vadd.f32 0.0, %v1686
  %v1688 = vpop.f32.mrf.mxu0
  %1689 = vmatprep.mubr.f32.mxu0 0.0
  %1690 = vmatmul.mubr.f32.gmra.mxu0 %v1610
  %v1691 = vpop.f32.mrf.mxu0
  %v1692 = vadd.f32 0.0, %v1691
  %v1693 = vpop.f32.mrf.mxu0
  %1694 = vmatprep.mubr.f32.mxu0 0.0
  %1695 = vmatmul.mubr.f32.gmra.mxu0 %v1613
  %v1696 = vpop.f32.mrf.mxu0
  %v1697 = vadd.f32 0.0, %v1696
  %v1698 = vpop.f32.mrf.mxu0
  %1699 = vdwg.mxu0
  %v1700 = vadd.f32 %v1599, %v1682
  %v1701 = vadd.f32 %v1600, %v1687
  %v1702 = vadd.f32 %v1601, %v1692
  %v1703 = vadd.f32 %v1602, %v1697
  %v1704 = vxor.u32 %v1700, 2147483648
  %v1705 = vxor.u32 %v1701, 2147483648
  %v1706 = vxor.u32 %v1702, 2147483648
  %v1707 = vxor.u32 %v1703, 2147483648
  %v1708 = vmul.f32 %v1704, 1.442695
  %v1709 = vpow.pop %v1708
  %v1710 = vmul.f32 %v1705, 1.442695
  %v1711 = vpow.pop %v1710
  %v1712 = vmul.f32 %v1706, 1.442695
  %v1713 = vpow.pop %v1712
  %v1714 = vmul.f32 %v1707, 1.442695
  %v1715 = vpow.pop %v1714
  %v1716 = vadd.f32 %v1709, 1.0
  %v1717 = vadd.f32 %v1711, 1.0
  %v1718 = vadd.f32 %v1713, 1.0
  %v1719 = vadd.f32 %v1715, 1.0
  %v1720 = vrcp.pop %v1716
  %v1721 = vmul.f32 1.0, %v1720
  %v1722 = vrcp.pop %v1717
  %v1723 = vmul.f32 1.0, %v1722
  %v1724 = vrcp.pop %v1718
  %v1725 = vmul.f32 1.0, %v1724
  %v1726 = vrcp.pop %v1719
  %v1727 = vmul.f32 1.0, %v1726
  %v1728 = vtanh.pop %v1700
  %v1729 = vtanh.pop %v1701
  %v1730 = vtanh.pop %v1702
  %v1731 = vtanh.pop %v1703
  %v1732 = vld [vmem:[#allocation3] sm:$0xff]
  %v1733 = vld [vmem:[#allocation3 + $0x8] sm:$0xff]
  %v1734 = vld [vmem:[#allocation3 + $0x10] sm:$0xff]
  %v1735 = vld [vmem:[#allocation3 + $0x18] sm:$0xff]
  %v1736 = vmul.f32 %v1721, %v1732
  %v1737 = vmul.f32 %v1723, %v1733
  %v1738 = vmul.f32 %v1725, %v1734
  %v1739 = vmul.f32 %v1727, %v1735
  %1744 = vrot.lane.b32.xlu0 %v1728, 104
  %v1745 = vpop.permute.xlu0 %1744
  %1746 = vrot.lane.b32.xlu0 %v1729, 104
  %v1747 = vpop.permute.xlu0 %1746
  %1748 = vrot.lane.b32.xlu0 %v1730, 104
  %v1749 = vpop.permute.xlu0 %1748
  %1750 = vrot.lane.b32.xlu0 %v1731, 104
  %v1751 = vpop.permute.xlu0 %1750
  %v1756 = vmul.f32 %v1721, %v1745
  %v1757 = vmul.f32 %v1723, %v1747
  %v1758 = vmul.f32 %v1725, %v1749
  %v1759 = vmul.f32 %v1727, %v1751
  %1764 = vrot.lane.b32.xlu0 %v1756, 116
  %v1765 = vpop.permute.xlu0 %1764
  %1766 = vrot.lane.b32.xlu0 %v1757, 116
  %v1767 = vpop.permute.xlu0 %1766
  %1768 = vrot.lane.b32.xlu0 %v1758, 116
  %v1769 = vpop.permute.xlu0 %1768
  %1770 = vrot.lane.b32.xlu0 %v1759, 116
  %v1771 = vpop.permute.xlu0 %1770
  %v1776 = vadd.f32 %v1736, %v1765
  %v1777 = vadd.f32 %v1737, %v1767
  %v1778 = vadd.f32 %v1738, %v1769
  %v1779 = vadd.f32 %v1739, %v1771
  %v1780 = vtanh.pop %v1776
  %v1781 = vtanh.pop %v1777
  %v1782 = vtanh.pop %v1778
  %v1783 = vtanh.pop %v1779
  %1788 = vrot.lane.b32.xlu0 %v1780, 24
  %v1789 = vpop.permute.xlu0 %1788
  %1790 = vrot.lane.b32.xlu0 %v1781, 24
  %v1791 = vpop.permute.xlu0 %1790
  %1792 = vrot.lane.b32.xlu0 %v1782, 24
  %v1793 = vpop.permute.xlu0 %1792
  %1794 = vrot.lane.b32.xlu0 %v1783, 24
  %v1795 = vpop.permute.xlu0 %1794
  %v1800 = vmul.f32 %v1721, %v1789
  %v1801 = vmul.f32 %v1723, %v1791
  %v1802 = vmul.f32 %v1725, %v1793
  %v1803 = vmul.f32 %v1727, %v1795
  %1804 = vst.msk [vmem:[#allocation3] sm:$0xff] %vm90, %v1776
  %1805 = vst.msk [vmem:[#allocation3 + $0x8] sm:$0xff] %vm90, %v1777
  %1806 = vst.msk [vmem:[#allocation3 + $0x10] sm:$0xff] %vm90, %v1778
  %1807 = vst.msk [vmem:[#allocation3 + $0x18] sm:$0xff] %vm90, %v1779
  %1812 = vrot.lane.b32.xlu0 %v1800, 104
  %v1813 = vpop.permute.xlu0 %1812
  %1814 = vrot.lane.b32.xlu0 %v1801, 104
  %v1815 = vpop.permute.xlu0 %1814
  %1816 = vrot.lane.b32.xlu0 %v1802, 104
  %v1817 = vpop.permute.xlu0 %1816
  %1818 = vrot.lane.b32.xlu0 %v1803, 104
  %v1819 = vpop.permute.xlu0 %1818
  %1824 = vst.msk [vmem:[#allocation2 + $0x1] sm:$0xff] %vm90, %v1813
  %1825 = vst.msk [vmem:[#allocation2 + $0x9] sm:$0xff] %vm90, %v1815
  %1826 = vst.msk [vmem:[#allocation2 + $0x19] sm:$0xff] %vm90, %v1817
  %1827 = vst.msk [vmem:[#allocation2 + $0x21] sm:$0xff] %vm90, %v1819
  %s1828 = scalar_lea.vmem %s2, 160
  %1829 = vst.msk [vmem:[%s1828] sm:$0xff] %vm90, %v1813
  %1830 = vst.msk [vmem:[%s1828 + $0x8] sm:$0xff] %vm90, %v1815
  %1831 = vst.msk [vmem:[%s1828 + $0x10] sm:$0xff] %vm90, %v1817
  %1832 = vst.msk [vmem:[%s1828 + $0x18] sm:$0xff] %vm90, %v1819
  %v1833 = vld [vmem:[#allocation2] sm:$0xff]
  %v1834 = vld [vmem:[#allocation2 + $0x8] sm:$0xff]
  %v1835 = vld [vmem:[#allocation2 + $0x10] sm:$0x3]
  %v1836 = vld [vmem:[#allocation2 + $0x18] sm:$0xff]
  %v1837 = vld [vmem:[#allocation2 + $0x20] sm:$0xff]
  %v1838 = vld [vmem:[#allocation2 + $0x28] sm:$0x3]
  %v1845 = vrot.slane %v1833, 1
  %v1846 = vrot.slane %v1834, 1
  %v1847 = vsel %vm44, %v1845, %v1846
  %v1848 = vrot.slane %v1835, 1
  %v1849 = vsel %vm44, %v1846, %v1848
  %v1850 = vrot.slane %v1836, 1
  %v1851 = vrot.slane %v1837, 1
  %v1852 = vsel %vm44, %v1850, %v1851
  %v1853 = vrot.slane %v1838, 1
  %v1854 = vsel %vm44, %v1851, %v1853
  %1855 = vrot.lane.b32.xlu0 %v1847, 12
  %v1856 = vpop.permute.xlu0 %1855
  %1857 = vrot.lane.b32.xlu0 %v1849, 12
  %v1858 = vpop.permute.xlu0 %1857
  %1859 = vrot.lane.b32.xlu0 %v1852, 12
  %v1860 = vpop.permute.xlu0 %1859
  %1861 = vrot.lane.b32.xlu0 %v1854, 12
  %v1862 = vpop.permute.xlu0 %1861
  %v1867 = vrot.slane %v1833, 2
  %v1868 = vrot.slane %v1834, 2
  %v1869 = vsel %vm67, %v1867, %v1868
  %v1870 = vrot.slane %v1835, 2
  %v1871 = vsel %vm67, %v1868, %v1870
  %v1872 = vrot.slane %v1836, 2
  %v1873 = vrot.slane %v1837, 2
  %v1874 = vsel %vm67, %v1872, %v1873
  %v1875 = vrot.slane %v1838, 2
  %v1876 = vsel %vm67, %v1873, %v1875
  %1877 = vrot.lane.b32.xlu0 %v1869, 24
  %v1878 = vpop.permute.xlu0 %1877
  %1879 = vrot.lane.b32.xlu0 %v1871, 24
  %v1880 = vpop.permute.xlu0 %1879
  %1881 = vrot.lane.b32.xlu0 %v1874, 24
  %v1882 = vpop.permute.xlu0 %1881
  %1883 = vrot.lane.b32.xlu0 %v1876, 24
  %v1884 = vpop.permute.xlu0 %1883
  %v1889 = vsel %vm90, %v1833, %v1856
  %v1890 = vsel %vm90, %v1834, %v1858
  %v1891 = vsel %vm90, %v1836, %v1860
  %v1892 = vsel %vm90, %v1837, %v1862
  %v1893 = vsel %vm95, %v1889, %v1878
  %v1894 = vsel %vm95, %v1890, %v1880
  %v1895 = vsel %vm95, %v1891, %v1882
  %v1896 = vsel %vm95, %v1892, %v1884
  %s1897 = scalar_lea.vmem %s0, 192
  %v1898 = vld [vmem:[%s1897] sm:$0xff]
  %v1899 = vld [vmem:[%s1897 + $0x8] sm:$0xff]
  %v1900 = vld [vmem:[%s1897 + $0x10] sm:$0xff]
  %v1901 = vld [vmem:[%s1897 + $0x18] sm:$0xff]
  %v1903 = vsel %vm104, %v1893, 0
  %v1906 = vsel %vm104, %v1894, 0
  %v1909 = vsel %vm104, %v1895, 0
  %v1912 = vsel %vm104, %v1896, 0
  %1914 = vmatprep.subr.mxu0 0.0
  %1915 = vmatpush1.msra.mxu0 0.0
  %1916 = vmatprep.subr.mxu0 0.0
  %1917 = vmatpush1.msra.mxu0 0.0
  %1918 = vmatprep.subr.mxu0 0.0
  %1919 = vmatpush1.msra.mxu0 0.0
  %1920 = vmatprep.subr.mxu0 0.0
  %1921 = vmatpush1.msra.mxu0 0.0
  %1922 = vmatprep.subr.mxu0 0.0
  %1923 = vmatpush1.msra.mxu0 0.0
  %1924 = vmatprep.subr.mxu0 0.0
  %1925 = vmatpush1.msra.mxu0 0.0
  %1926 = vmatprep.subr.mxu0 0.0
  %1927 = vmatpush1.msra.mxu0 0.0
  %1928 = vmatprep.subr.mxu0 0.0
  %1929 = vmatpush1.msra.mxu0 0.0
  %1930 = vmatprep.subr.mxu0 0.0
  %1931 = vmatpush1.msra.mxu0 0.0
  %1932 = vmatprep.subr.mxu0 0.0
  %1933 = vmatpush1.msra.mxu0 0.0
  %1934 = vmatprep.subr.mxu0 0.0
  %1935 = vmatpush1.msra.mxu0 0.0
  %1936 = vmatprep.subr.mxu0 0.0
  %1937 = vmatpush1.msra.mxu0 %v119
  %1938 = vmatprep.subr.mxu0 0.0
  %1939 = vmatpush1.msra.mxu0 %v30
  %1940 = vmatprep.subr.mxu0 0.0
  %1941 = vmatpush1.msra.mxu0 %v29
  %1942 = vmatprep.subr.mxu0 0.0
  %1943 = vmatpush1.msra.mxu0 %v28
  %1944 = vmatprep.subr.mxu0 0.0
  %1945 = vmatpush1.msra.mxu0 %v27
  %1946 = vmatprep.subr.mxu0 0.0
  %1947 = vmatpush2.msra.mxu0 0.0
  %1948 = vmatprep.subr.mxu0 0.0
  %1949 = vmatpush2.msra.mxu0 0.0
  %1950 = vmatprep.subr.mxu0 0.0
  %1951 = vmatpush2.msra.mxu0 0.0
  %1952 = vmatprep.subr.mxu0 0.0
  %1953 = vmatpush2.msra.mxu0 0.0
  %1954 = vmatprep.subr.mxu0 0.0
  %1955 = vmatpush2.msra.mxu0 0.0
  %1956 = vmatprep.subr.mxu0 0.0
  %1957 = vmatpush2.msra.mxu0 0.0
  %1958 = vmatprep.subr.mxu0 0.0
  %1959 = vmatpush2.msra.mxu0 0.0
  %1960 = vmatprep.subr.mxu0 0.0
  %1961 = vmatpush2.msra.mxu0 0.0
  %1962 = vmatprep.subr.mxu0 0.0
  %1963 = vmatpush2.msra.mxu0 0.0
  %1964 = vmatprep.subr.mxu0 0.0
  %1965 = vmatpush2.msra.mxu0 0.0
  %1966 = vmatprep.subr.mxu0 0.0
  %1967 = vmatpush2.msra.mxu0 0.0
  %1968 = vmatprep.subr.mxu0 0.0
  %1969 = vmatpush2.msra.mxu0 0.0
  %1970 = vmatprep.subr.mxu0 0.0
  %1971 = vmatpush2.msra.mxu0 0.0
  %1972 = vmatprep.subr.mxu0 0.0
  %1973 = vmatpush2.msra.mxu0 0.0
  %1974 = vmatprep.subr.mxu0 0.0
  %1975 = vmatpush2.msra.mxu0 0.0
  %1976 = vmatprep.subr.mxu0 0.0
  %1977 = vmatpush2.msra.mxu0 0.0
  %1978 = vmatprep.mubr.f32.mxu0 0.0
  %1979 = vmatmul.mubr.f32.gmra.mxu0 %v1903
  %v1980 = vpop.f32.mrf.mxu0
  %v1981 = vadd.f32 0.0, %v1980
  %v1982 = vpop.f32.mrf.mxu0
  %1983 = vmatprep.mubr.f32.mxu0 0.0
  %1984 = vmatmul.mubr.f32.gmra.mxu0 %v1906
  %v1985 = vpop.f32.mrf.mxu0
  %v1986 = vadd.f32 0.0, %v1985
  %v1987 = vpop.f32.mrf.mxu0
  %1988 = vmatprep.mubr.f32.mxu0 0.0
  %1989 = vmatmul.mubr.f32.gmra.mxu0 %v1909
  %v1990 = vpop.f32.mrf.mxu0
  %v1991 = vadd.f32 0.0, %v1990
  %v1992 = vpop.f32.mrf.mxu0
  %1993 = vmatprep.mubr.f32.mxu0 0.0
  %1994 = vmatmul.mubr.f32.gmra.mxu0 %v1912
  %v1995 = vpop.f32.mrf.mxu0
  %v1996 = vadd.f32 0.0, %v1995
  %v1997 = vpop.f32.mrf.mxu0
  %1998 = vdwg.mxu0
  %v1999 = vadd.f32 %v1898, %v1981
  %v2000 = vadd.f32 %v1899, %v1986
  %v2001 = vadd.f32 %v1900, %v1991
  %v2002 = vadd.f32 %v1901, %v1996
  %v2003 = vxor.u32 %v1999, 2147483648
  %v2004 = vxor.u32 %v2000, 2147483648
  %v2005 = vxor.u32 %v2001, 2147483648
  %v2006 = vxor.u32 %v2002, 2147483648
  %v2007 = vmul.f32 %v2003, 1.442695
  %v2008 = vpow.pop %v2007
  %v2009 = vmul.f32 %v2004, 1.442695
  %v2010 = vpow.pop %v2009
  %v2011 = vmul.f32 %v2005, 1.442695
  %v2012 = vpow.pop %v2011
  %v2013 = vmul.f32 %v2006, 1.442695
  %v2014 = vpow.pop %v2013
  %v2015 = vadd.f32 %v2008, 1.0
  %v2016 = vadd.f32 %v2010, 1.0
  %v2017 = vadd.f32 %v2012, 1.0
  %v2018 = vadd.f32 %v2014, 1.0
  %v2019 = vrcp.pop %v2015
  %v2020 = vmul.f32 1.0, %v2019
  %v2021 = vrcp.pop %v2016
  %v2022 = vmul.f32 1.0, %v2021
  %v2023 = vrcp.pop %v2017
  %v2024 = vmul.f32 1.0, %v2023
  %v2025 = vrcp.pop %v2018
  %v2026 = vmul.f32 1.0, %v2025
  %v2027 = vtanh.pop %v1999
  %v2028 = vtanh.pop %v2000
  %v2029 = vtanh.pop %v2001
  %v2030 = vtanh.pop %v2002
  %v2031 = vld [vmem:[#allocation3] sm:$0xff]
  %v2032 = vld [vmem:[#allocation3 + $0x8] sm:$0xff]
  %v2033 = vld [vmem:[#allocation3 + $0x10] sm:$0xff]
  %v2034 = vld [vmem:[#allocation3 + $0x18] sm:$0xff]
  %v2035 = vmul.f32 %v2020, %v2031
  %v2036 = vmul.f32 %v2022, %v2032
  %v2037 = vmul.f32 %v2024, %v2033
  %v2038 = vmul.f32 %v2026, %v2034
  %2043 = vrot.lane.b32.xlu0 %v2027, 104
  %v2044 = vpop.permute.xlu0 %2043
  %2045 = vrot.lane.b32.xlu0 %v2028, 104
  %v2046 = vpop.permute.xlu0 %2045
  %2047 = vrot.lane.b32.xlu0 %v2029, 104
  %v2048 = vpop.permute.xlu0 %2047
  %2049 = vrot.lane.b32.xlu0 %v2030, 104
  %v2050 = vpop.permute.xlu0 %2049
  %v2055 = vmul.f32 %v2020, %v2044
  %v2056 = vmul.f32 %v2022, %v2046
  %v2057 = vmul.f32 %v2024, %v2048
  %v2058 = vmul.f32 %v2026, %v2050
  %2063 = vrot.lane.b32.xlu0 %v2055, 116
  %v2064 = vpop.permute.xlu0 %2063
  %2065 = vrot.lane.b32.xlu0 %v2056, 116
  %v2066 = vpop.permute.xlu0 %2065
  %2067 = vrot.lane.b32.xlu0 %v2057, 116
  %v2068 = vpop.permute.xlu0 %2067
  %2069 = vrot.lane.b32.xlu0 %v2058, 116
  %v2070 = vpop.permute.xlu0 %2069
  %v2075 = vadd.f32 %v2035, %v2064
  %v2076 = vadd.f32 %v2036, %v2066
  %v2077 = vadd.f32 %v2037, %v2068
  %v2078 = vadd.f32 %v2038, %v2070
  %v2079 = vtanh.pop %v2075
  %v2080 = vtanh.pop %v2076
  %v2081 = vtanh.pop %v2077
  %v2082 = vtanh.pop %v2078
  %2087 = vrot.lane.b32.xlu0 %v2079, 24
  %v2088 = vpop.permute.xlu0 %2087
  %2089 = vrot.lane.b32.xlu0 %v2080, 24
  %v2090 = vpop.permute.xlu0 %2089
  %2091 = vrot.lane.b32.xlu0 %v2081, 24
  %v2092 = vpop.permute.xlu0 %2091
  %2093 = vrot.lane.b32.xlu0 %v2082, 24
  %v2094 = vpop.permute.xlu0 %2093
  %v2099 = vmul.f32 %v2020, %v2088
  %v2100 = vmul.f32 %v2022, %v2090
  %v2101 = vmul.f32 %v2024, %v2092
  %v2102 = vmul.f32 %v2026, %v2094
  %2103 = vst.msk [vmem:[#allocation3] sm:$0xff] %vm90, %v2075
  %2104 = vst.msk [vmem:[#allocation3 + $0x8] sm:$0xff] %vm90, %v2076
  %2105 = vst.msk [vmem:[#allocation3 + $0x10] sm:$0xff] %vm90, %v2077
  %2106 = vst.msk [vmem:[#allocation3 + $0x18] sm:$0xff] %vm90, %v2078
  %2111 = vrot.lane.b32.xlu0 %v2099, 104
  %v2112 = vpop.permute.xlu0 %2111
  %2113 = vrot.lane.b32.xlu0 %v2100, 104
  %v2114 = vpop.permute.xlu0 %2113
  %2115 = vrot.lane.b32.xlu0 %v2101, 104
  %v2116 = vpop.permute.xlu0 %2115
  %2117 = vrot.lane.b32.xlu0 %v2102, 104
  %v2118 = vpop.permute.xlu0 %2117
  %2123 = vst.msk [vmem:[#allocation2 + $0x1] sm:$0xff] %vm90, %v2112
  %2124 = vst.msk [vmem:[#allocation2 + $0x9] sm:$0xff] %vm90, %v2114
  %2125 = vst.msk [vmem:[#allocation2 + $0x19] sm:$0xff] %vm90, %v2116
  %2126 = vst.msk [vmem:[#allocation2 + $0x21] sm:$0xff] %vm90, %v2118
  %s2127 = scalar_lea.vmem %s2, 192
  %2128 = vst.msk [vmem:[%s2127] sm:$0xff] %vm90, %v2112
  %2129 = vst.msk [vmem:[%s2127 + $0x8] sm:$0xff] %vm90, %v2114
  %2130 = vst.msk [vmem:[%s2127 + $0x10] sm:$0xff] %vm90, %v2116
  %2131 = vst.msk [vmem:[%s2127 + $0x18] sm:$0xff] %vm90, %v2118
  %v2132 = vld [vmem:[#allocation2] sm:$0xff]
  %v2133 = vld [vmem:[#allocation2 + $0x8] sm:$0xff]
  %v2134 = vld [vmem:[#allocation2 + $0x10] sm:$0x3]
  %v2135 = vld [vmem:[#allocation2 + $0x18] sm:$0xff]
  %v2136 = vld [vmem:[#allocation2 + $0x20] sm:$0xff]
  %v2137 = vld [vmem:[#allocation2 + $0x28] sm:$0x3]
  %v2144 = vrot.slane %v2132, 1
  %v2145 = vrot.slane %v2133, 1
  %v2146 = vsel %vm44, %v2144, %v2145
  %v2147 = vrot.slane %v2134, 1
  %v2148 = vsel %vm44, %v2145, %v2147
  %v2149 = vrot.slane %v2135, 1
  %v2150 = vrot.slane %v2136, 1
  %v2151 = vsel %vm44, %v2149, %v2150
  %v2152 = vrot.slane %v2137, 1
  %v2153 = vsel %vm44, %v2150, %v2152
  %2154 = vrot.lane.b32.xlu0 %v2146, 12
  %v2155 = vpop.permute.xlu0 %2154
  %2156 = vrot.lane.b32.xlu0 %v2148, 12
  %v2157 = vpop.permute.xlu0 %2156
  %2158 = vrot.lane.b32.xlu0 %v2151, 12
  %v2159 = vpop.permute.xlu0 %2158
  %2160 = vrot.lane.b32.xlu0 %v2153, 12
  %v2161 = vpop.permute.xlu0 %2160
  %v2166 = vrot.slane %v2132, 2
  %v2167 = vrot.slane %v2133, 2
  %v2168 = vsel %vm67, %v2166, %v2167
  %v2169 = vrot.slane %v2134, 2
  %v2170 = vsel %vm67, %v2167, %v2169
  %v2171 = vrot.slane %v2135, 2
  %v2172 = vrot.slane %v2136, 2
  %v2173 = vsel %vm67, %v2171, %v2172
  %v2174 = vrot.slane %v2137, 2
  %v2175 = vsel %vm67, %v2172, %v2174
  %2176 = vrot.lane.b32.xlu0 %v2168, 24
  %v2177 = vpop.permute.xlu0 %2176
  %2178 = vrot.lane.b32.xlu0 %v2170, 24
  %v2179 = vpop.permute.xlu0 %2178
  %2180 = vrot.lane.b32.xlu0 %v2173, 24
  %v2181 = vpop.permute.xlu0 %2180
  %2182 = vrot.lane.b32.xlu0 %v2175, 24
  %v2183 = vpop.permute.xlu0 %2182
  %v2188 = vsel %vm90, %v2132, %v2155
  %v2189 = vsel %vm90, %v2133, %v2157
  %v2190 = vsel %vm90, %v2135, %v2159
  %v2191 = vsel %vm90, %v2136, %v2161
  %v2192 = vsel %vm95, %v2188, %v2177
  %v2193 = vsel %vm95, %v2189, %v2179
  %v2194 = vsel %vm95, %v2190, %v2181
  %v2195 = vsel %vm95, %v2191, %v2183
  %s2196 = scalar_lea.vmem %s0, 224
  %v2197 = vld [vmem:[%s2196] sm:$0xff]
  %v2198 = vld [vmem:[%s2196 + $0x8] sm:$0xff]
  %v2199 = vld [vmem:[%s2196 + $0x10] sm:$0xff]
  %v2200 = vld [vmem:[%s2196 + $0x18] sm:$0xff]
  %v2202 = vsel %vm104, %v2192, 0
  %v2205 = vsel %vm104, %v2193, 0
  %v2208 = vsel %vm104, %v2194, 0
  %v2211 = vsel %vm104, %v2195, 0
  %2213 = vmatprep.subr.mxu0 0.0
  %2214 = vmatpush1.msra.mxu0 0.0
  %2215 = vmatprep.subr.mxu0 0.0
  %2216 = vmatpush1.msra.mxu0 0.0
  %2217 = vmatprep.subr.mxu0 0.0
  %2218 = vmatpush1.msra.mxu0 0.0
  %2219 = vmatprep.subr.mxu0 0.0
  %2220 = vmatpush1.msra.mxu0 0.0
  %2221 = vmatprep.subr.mxu0 0.0
  %2222 = vmatpush1.msra.mxu0 0.0
  %2223 = vmatprep.subr.mxu0 0.0
  %2224 = vmatpush1.msra.mxu0 0.0
  %2225 = vmatprep.subr.mxu0 0.0
  %2226 = vmatpush1.msra.mxu0 0.0
  %2227 = vmatprep.subr.mxu0 0.0
  %2228 = vmatpush1.msra.mxu0 0.0
  %2229 = vmatprep.subr.mxu0 0.0
  %2230 = vmatpush1.msra.mxu0 0.0
  %2231 = vmatprep.subr.mxu0 0.0
  %2232 = vmatpush1.msra.mxu0 0.0
  %2233 = vmatprep.subr.mxu0 0.0
  %2234 = vmatpush1.msra.mxu0 0.0
  %2235 = vmatprep.subr.mxu0 0.0
  %2236 = vmatpush1.msra.mxu0 %v119
  %2237 = vmatprep.subr.mxu0 0.0
  %2238 = vmatpush1.msra.mxu0 %v30
  %2239 = vmatprep.subr.mxu0 0.0
  %2240 = vmatpush1.msra.mxu0 %v29
  %2241 = vmatprep.subr.mxu0 0.0
  %2242 = vmatpush1.msra.mxu0 %v28
  %2243 = vmatprep.subr.mxu0 0.0
  %2244 = vmatpush1.msra.mxu0 %v27
  %2245 = vmatprep.subr.mxu0 0.0
  %2246 = vmatpush2.msra.mxu0 0.0
  %2247 = vmatprep.subr.mxu0 0.0
  %2248 = vmatpush2.msra.mxu0 0.0
  %2249 = vmatprep.subr.mxu0 0.0
  %2250 = vmatpush2.msra.mxu0 0.0
  %2251 = vmatprep.subr.mxu0 0.0
  %2252 = vmatpush2.msra.mxu0 0.0
  %2253 = vmatprep.subr.mxu0 0.0
  %2254 = vmatpush2.msra.mxu0 0.0
  %2255 = vmatprep.subr.mxu0 0.0
  %2256 = vmatpush2.msra.mxu0 0.0
  %2257 = vmatprep.subr.mxu0 0.0
  %2258 = vmatpush2.msra.mxu0 0.0
  %2259 = vmatprep.subr.mxu0 0.0
  %2260 = vmatpush2.msra.mxu0 0.0
  %2261 = vmatprep.subr.mxu0 0.0
  %2262 = vmatpush2.msra.mxu0 0.0
  %2263 = vmatprep.subr.mxu0 0.0
  %2264 = vmatpush2.msra.mxu0 0.0
  %2265 = vmatprep.subr.mxu0 0.0
  %2266 = vmatpush2.msra.mxu0 0.0
  %2267 = vmatprep.subr.mxu0 0.0
  %2268 = vmatpush2.msra.mxu0 0.0
  %2269 = vmatprep.subr.mxu0 0.0
  %2270 = vmatpush2.msra.mxu0 0.0
  %2271 = vmatprep.subr.mxu0 0.0
  %2272 = vmatpush2.msra.mxu0 0.0
  %2273 = vmatprep.subr.mxu0 0.0
  %2274 = vmatpush2.msra.mxu0 0.0
  %2275 = vmatprep.subr.mxu0 0.0
  %2276 = vmatpush2.msra.mxu0 0.0
  %2277 = vmatprep.mubr.f32.mxu0 0.0
  %2278 = vmatmul.mubr.f32.gmra.mxu0 %v2202
  %v2279 = vpop.f32.mrf.mxu0
  %v2280 = vadd.f32 0.0, %v2279
  %v2281 = vpop.f32.mrf.mxu0
  %2282 = vmatprep.mubr.f32.mxu0 0.0
  %2283 = vmatmul.mubr.f32.gmra.mxu0 %v2205
  %v2284 = vpop.f32.mrf.mxu0
  %v2285 = vadd.f32 0.0, %v2284
  %v2286 = vpop.f32.mrf.mxu0
  %2287 = vmatprep.mubr.f32.mxu0 0.0
  %2288 = vmatmul.mubr.f32.gmra.mxu0 %v2208
  %v2289 = vpop.f32.mrf.mxu0
  %v2290 = vadd.f32 0.0, %v2289
  %v2291 = vpop.f32.mrf.mxu0
  %2292 = vmatprep.mubr.f32.mxu0 0.0
  %2293 = vmatmul.mubr.f32.gmra.mxu0 %v2211
  %v2294 = vpop.f32.mrf.mxu0
  %v2295 = vadd.f32 0.0, %v2294
  %v2296 = vpop.f32.mrf.mxu0
  %2297 = vdwg.mxu0
  %v2298 = vadd.f32 %v2197, %v2280
  %v2299 = vadd.f32 %v2198, %v2285
  %v2300 = vadd.f32 %v2199, %v2290
  %v2301 = vadd.f32 %v2200, %v2295
  %v2302 = vxor.u32 %v2298, 2147483648
  %v2303 = vxor.u32 %v2299, 2147483648
  %v2304 = vxor.u32 %v2300, 2147483648
  %v2305 = vxor.u32 %v2301, 2147483648
  %v2306 = vmul.f32 %v2302, 1.442695
  %v2307 = vpow.pop %v2306
  %v2308 = vmul.f32 %v2303, 1.442695
  %v2309 = vpow.pop %v2308
  %v2310 = vmul.f32 %v2304, 1.442695
  %v2311 = vpow.pop %v2310
  %v2312 = vmul.f32 %v2305, 1.442695
  %v2313 = vpow.pop %v2312
  %v2314 = vadd.f32 %v2307, 1.0
  %v2315 = vadd.f32 %v2309, 1.0
  %v2316 = vadd.f32 %v2311, 1.0
  %v2317 = vadd.f32 %v2313, 1.0
  %v2318 = vrcp.pop %v2314
  %v2319 = vmul.f32 1.0, %v2318
  %v2320 = vrcp.pop %v2315
  %v2321 = vmul.f32 1.0, %v2320
  %v2322 = vrcp.pop %v2316
  %v2323 = vmul.f32 1.0, %v2322
  %v2324 = vrcp.pop %v2317
  %v2325 = vmul.f32 1.0, %v2324
  %v2326 = vtanh.pop %v2298
  %v2327 = vtanh.pop %v2299
  %v2328 = vtanh.pop %v2300
  %v2329 = vtanh.pop %v2301
  %v2330 = vld [vmem:[#allocation3] sm:$0xff]
  %v2331 = vld [vmem:[#allocation3 + $0x8] sm:$0xff]
  %v2332 = vld [vmem:[#allocation3 + $0x10] sm:$0xff]
  %v2333 = vld [vmem:[#allocation3 + $0x18] sm:$0xff]
  %v2334 = vmul.f32 %v2319, %v2330
  %v2335 = vmul.f32 %v2321, %v2331
  %v2336 = vmul.f32 %v2323, %v2332
  %v2337 = vmul.f32 %v2325, %v2333
  %2342 = vrot.lane.b32.xlu0 %v2326, 104
  %v2343 = vpop.permute.xlu0 %2342
  %2344 = vrot.lane.b32.xlu0 %v2327, 104
  %v2345 = vpop.permute.xlu0 %2344
  %2346 = vrot.lane.b32.xlu0 %v2328, 104
  %v2347 = vpop.permute.xlu0 %2346
  %2348 = vrot.lane.b32.xlu0 %v2329, 104
  %v2349 = vpop.permute.xlu0 %2348
  %v2354 = vmul.f32 %v2319, %v2343
  %v2355 = vmul.f32 %v2321, %v2345
  %v2356 = vmul.f32 %v2323, %v2347
  %v2357 = vmul.f32 %v2325, %v2349
  %2362 = vrot.lane.b32.xlu0 %v2354, 116
  %v2363 = vpop.permute.xlu0 %2362
  %2364 = vrot.lane.b32.xlu0 %v2355, 116
  %v2365 = vpop.permute.xlu0 %2364
  %2366 = vrot.lane.b32.xlu0 %v2356, 116
  %v2367 = vpop.permute.xlu0 %2366
  %2368 = vrot.lane.b32.xlu0 %v2357, 116
  %v2369 = vpop.permute.xlu0 %2368
  %v2374 = vadd.f32 %v2334, %v2363
  %v2375 = vadd.f32 %v2335, %v2365
  %v2376 = vadd.f32 %v2336, %v2367
  %v2377 = vadd.f32 %v2337, %v2369
  %v2378 = vtanh.pop %v2374
  %v2379 = vtanh.pop %v2375
  %v2380 = vtanh.pop %v2376
  %v2381 = vtanh.pop %v2377
  %2386 = vrot.lane.b32.xlu0 %v2378, 24
  %v2387 = vpop.permute.xlu0 %2386
  %2388 = vrot.lane.b32.xlu0 %v2379, 24
  %v2389 = vpop.permute.xlu0 %2388
  %2390 = vrot.lane.b32.xlu0 %v2380, 24
  %v2391 = vpop.permute.xlu0 %2390
  %2392 = vrot.lane.b32.xlu0 %v2381, 24
  %v2393 = vpop.permute.xlu0 %2392
  %v2398 = vmul.f32 %v2319, %v2387
  %v2399 = vmul.f32 %v2321, %v2389
  %v2400 = vmul.f32 %v2323, %v2391
  %v2401 = vmul.f32 %v2325, %v2393
  %2402 = vst.msk [vmem:[#allocation3] sm:$0xff] %vm90, %v2374
  %2403 = vst.msk [vmem:[#allocation3 + $0x8] sm:$0xff] %vm90, %v2375
  %2404 = vst.msk [vmem:[#allocation3 + $0x10] sm:$0xff] %vm90, %v2376
  %2405 = vst.msk [vmem:[#allocation3 + $0x18] sm:$0xff] %vm90, %v2377
  %2410 = vrot.lane.b32.xlu0 %v2398, 104
  %v2411 = vpop.permute.xlu0 %2410
  %2412 = vrot.lane.b32.xlu0 %v2399, 104
  %v2413 = vpop.permute.xlu0 %2412
  %2414 = vrot.lane.b32.xlu0 %v2400, 104
  %v2415 = vpop.permute.xlu0 %2414
  %2416 = vrot.lane.b32.xlu0 %v2401, 104
  %v2417 = vpop.permute.xlu0 %2416
  %2422 = vst.msk [vmem:[#allocation2 + $0x1] sm:$0xff] %vm90, %v2411
  %2423 = vst.msk [vmem:[#allocation2 + $0x9] sm:$0xff] %vm90, %v2413
  %2424 = vst.msk [vmem:[#allocation2 + $0x19] sm:$0xff] %vm90, %v2415
  %2425 = vst.msk [vmem:[#allocation2 + $0x21] sm:$0xff] %vm90, %v2417
  %s2426 = scalar_lea.vmem %s2, 224
  %2427 = vst.msk [vmem:[%s2426] sm:$0xff] %vm90, %v2411
  %2428 = vst.msk [vmem:[%s2426 + $0x8] sm:$0xff] %vm90, %v2413
  %2429 = vst.msk [vmem:[%s2426 + $0x10] sm:$0xff] %vm90, %v2415
  %2430 = vst.msk [vmem:[%s2426 + $0x18] sm:$0xff] %vm90, %v2417
  // Predicated region
  $region14: #{pixel_rnn_layer.1} parent=0 // pred_check
    _
  $region15: #{pixel_rnn_layer.1} parent=0 // pred_check_branch
    %2432 = sbr.rel (0) target = $region17
  $region16: #{pixel_rnn_layer.1} parent=0 // pred_region
    _
  $region17: #{pixel_rnn_layer.1} parent=0 // pred_fallthru
    _
  // Predicated region
  $region18: #{pixel_rnn_layer.1} parent=0 // pred_check
    _
  $region19: #{pixel_rnn_layer.1} parent=0 // pred_check_branch
    %2434 = sbr.rel (0) target = $region21
  $region20: #{pixel_rnn_layer.1} parent=0 // pred_region
    _
  $region21: #{pixel_rnn_layer.1} parent=0 // pred_fallthru
    _

</llo_original>
